<compile_context>
chip_gen: v6e
topology: v6e:2x2x1
jax: 0.10.0
libtpu: 0.0.40
codegen_flags: <defaults>
</compile_context>

<pallas_src>
import functools

import jax
import jax.numpy as jnp
from jax import lax
from jax.experimental import pallas as pl
from jax.experimental.pallas import tpu as pltpu

BN_EPS = 1e-5
DEFAULT_TILE_M = 512                      # output pixels per grid step
VMEM_WORKING_SET_BUDGET = 24 * 1024 * 1024   # v7x-safe (64 MiB physical VMEM per TC)


def _round_up(x, m):
    return ((x + m - 1) // m) * m


def _pick_tile_m(m, kd, cp, requested):
    """Largest multiple-of-8 tile <= requested that keeps the VMEM working set small."""
    tile = min(max(requested, 8), max(_round_up(m, 8), 8))
    tile = max(8, (tile // 8) * 8)
    kd_lanes = _round_up(kd, 128)            # lane padding of the patch tile in VMEM

    def vmem_bytes(t):
        return (2 * t * kd_lanes * 2         # double-buffered bf16 patch tile
                + 2 * t * cp * 2             # double-buffered bf16 g tile
                + t * 2 * cp * 4             # f32 matmul / activation intermediates
                + 2 * kd_lanes * 2 * cp * 2)  # fused weight slab (+ buffering slack)

    while tile > 8 and vmem_bytes(tile) > VMEM_WORKING_SET_BUDGET:
        tile = max(8, ((tile // 2) // 8) * 8)
    return tile


def _pass1_kernel(patches_ref, wcat_ref, bcat_ref, g_ref, stats_ref,
                  *, tile_m, cp, m_total):
    """Fused conv_f/conv_m matmul + ELU + sigmoid gate + BN partial stats.

    patches_ref : (tile_m, KD)    bf16 im2col tile (unpadded contraction)
    wcat_ref    : (KD, 2*cp)      bf16 [W_f | W_m] (channel-padded)
    bcat_ref    : (1, 2*cp)       f32  [b_f | b_m] (channel-padded)
    g_ref       : (tile_m, cp)    bf16 gated activation tile
    stats_ref   : (8, cp)         f32  row0 = sum(g), row1 = sum(g^2); rows 2-7 unused
    """
    p = patches_ref[...]
    y = jnp.dot(p, wcat_ref[...], preferred_element_type=jnp.float32)
    y = y + bcat_ref[...]                                   # (tile_m, 2*cp) f32
    f = y[:, :cp]                                           # vreg-aligned split
    m = y[:, cp:]
    # ELU(alpha=1): exp on the clamped value avoids overflow in the untaken branch.
    f = jnp.where(f > 0.0, f, jnp.exp(jnp.minimum(f, 0.0)) - 1.0)
    # Sigmoid gate — exp + reciprocal both land on the EUP slot (mem-bound kernel).
    m = pl.reciprocal(1.0 + jnp.exp(-m), approx=False)
    g = f * m                                               # f32, (tile_m, cp)

    # Per-channel partial sums for train-mode BatchNorm, computed from the f32
    # value before the bf16 store; padded rows (>= m_total) must not contribute.
    row0 = pl.program_id(0) * tile_m
    rows = row0 + lax.broadcasted_iota(jnp.int32, (tile_m, 1), 0)
    valid = (rows < m_total).astype(jnp.float32)
    gm = g * valid
    stats_ref[0:1, :] = jnp.sum(gm, axis=0, keepdims=True)          # sum(g)
    stats_ref[1:2, :] = jnp.sum(gm * g, axis=0, keepdims=True)      # sum(g^2)

    g_ref[...] = g.astype(g_ref.dtype)                      # bf16 stream to HBM


def _pass2_kernel(g_ref, scale_ref, shift_ref, out_ref):
    """Apply BatchNorm affine: out = g * scale + shift (g streamed as bf16)."""
    out_ref[...] = g_ref[...].astype(jnp.float32) * scale_ref[...] + shift_ref[...]


def gated_conv2d(x, params, *, filter_size=3, stride=1, dilation=1,
                 tile_m=DEFAULT_TILE_M):
    """Forward pass of GatedConv2d.  x: (N, Cin, H, W) float32, NCHW."""
    wf, bf, wm, bm, gamma, beta = (params[k] for k in
                                   ("wf", "bf", "wm", "bm", "gamma", "beta"))
    N, Cin, H, W = x.shape
    K = filter_size
    Cout = wf.shape[0]

    # --- reflect pad, then cast bf16 + NHWC BEFORE im2col ---------------------
    pad = int(dilation * (K - 1) / 2)
    x_pad = jnp.pad(x, ((0, 0), (0, 0), (pad, pad), (pad, pad)), mode="reflect")
    Hp, Wp = H + 2 * pad, W + 2 * pad
    Ho = (Hp - dilation * (K - 1) - 1) // stride + 1
    Wo = (Wp - dilation * (K - 1) - 1) // stride + 1

    # Cast / transpose the small array; every later materialization is bf16 and
    # no transpose of the K*K-inflated patch matrix is needed.
    x_nhwc = x_pad.astype(jnp.bfloat16).transpose(0, 2, 3, 1)      # (N, Hp, Wp, Cin)

    cols = []
    for kh in range(K):
        for kw in range(K):
            cols.append(lax.slice(
                x_nhwc,
                (0, kh * dilation, kw * dilation, 0),
                (N,
                 kh * dilation + (Ho - 1) * stride + 1,
                 kw * dilation + (Wo - 1) * stride + 1,
                 Cin),
                (1, stride, stride, 1)))                            # (N, Ho, Wo, Cin)
    # Flatten order is (kh, kw, c); the (tiny) weight is rearranged to match.
    patches = jnp.concatenate(cols, axis=-1).reshape(N * Ho * Wo, K * K * Cin)
    # TODO(synk): in-kernel im2col (NHWC x_pad tile + K*K shifted-slice matmuls
    # accumulating in VMEM) would remove the remaining K*K HBM blow-up entirely.

    M = N * Ho * Wo
    KD = Cin * K * K
    CP = _round_up(Cout, 128)            # vreg-aligned f/m split, lane-dense stores
    NPAD = 2 * CP                        # fused (feature|mask) output width

    tile_m = _pick_tile_m(M, KD, CP, tile_m)
    M_PAD = _round_up(M, tile_m)
    n_tiles = M_PAD // tile_m

    # Only row padding; the contraction dim stays KD in HBM (full-dim block is
    # legal, Mosaic pads the unaligned contraction in VMEM).
    patches = jnp.pad(patches, ((0, M_PAD - M), (0, 0)))

    def pack_w(w):                       # (Cout, Cin, K, K) -> (KD, CP), order (kh,kw,c)
        w2 = w.transpose(2, 3, 1, 0).reshape(KD, Cout)
        return jnp.pad(w2, ((0, 0), (0, CP - Cout)))

    wcat = jnp.concatenate([pack_w(wf), pack_w(wm)], axis=1).astype(jnp.bfloat16)
    pad_c = lambda v: jnp.pad(v.astype(jnp.float32), (0, CP - Cout))
    bcat = jnp.concatenate([pad_c(bf), pad_c(bm)]).reshape(1, NPAD)

    cparams = pltpu.CompilerParams(
        dimension_semantics=("parallel",),           # independent M tiles (megacore)
        vmem_limit_bytes=64 * 1024 * 1024)

    # ---- pass 1: fused conv/gate + BN partial statistics ---------------------
    cost1 = pl.CostEstimate(
        flops=2 * M_PAD * KD * NPAD + 12 * M_PAD * NPAD,
        transcendentals=2 * M_PAD * CP,
        bytes_accessed=(M_PAD * KD * 2 + KD * NPAD * 2 + NPAD * 4
                        + M_PAD * CP * 2 + n_tiles * 8 * CP * 4))
    g, stats = pl.pallas_call(
        functools.partial(_pass1_kernel, tile_m=tile_m, cp=CP, m_total=M),
        out_shape=(jax.ShapeDtypeStruct((M_PAD, CP), jnp.bfloat16),
                   jax.ShapeDtypeStruct((n_tiles * 8, CP), jnp.float32)),
        grid=(n_tiles,),
        in_specs=[pl.BlockSpec((tile_m, KD), lambda i: (i, 0)),
                  pl.BlockSpec((KD, NPAD), lambda i: (0, 0)),
                  pl.BlockSpec((1, NPAD), lambda i: (0, 0))],
        out_specs=(pl.BlockSpec((tile_m, CP), lambda i: (i, 0)),
                   pl.BlockSpec((8, CP), lambda i: (i, 0))),
        compiler_params=cparams,
        cost_estimate=cost1,
    )(patches, wcat, bcat)

    # ---- combine partials -> train-mode BN scale/shift (tiny, plain JAX) -----
    stats = stats.reshape(n_tiles, 8, CP)
    total_sum = jnp.sum(stats[:, 0, :], axis=0)
    total_sq = jnp.sum(stats[:, 1, :], axis=0)
    mean = total_sum / M
    var = jnp.maximum(total_sq / M - mean * mean, 0.0)    # biased variance
    inv = lax.rsqrt(var + BN_EPS)
    scale = (pad_c(gamma) * inv).reshape(1, CP)
    shift = (pad_c(beta) - mean * pad_c(gamma) * inv).reshape(1, CP)
    # TODO(synk): BatchNorm2d running-statistics (momentum) buffer updates are
    # not modeled; only the train-mode forward output is produced.

    # ---- pass 2: apply normalization ------------------------------------------
    cost2 = pl.CostEstimate(
        flops=2 * M_PAD * CP, transcendentals=0,
        bytes_accessed=M_PAD * CP * 2 + M_PAD * CP * 4 + 2 * CP * 4)
    out2d = pl.pallas_call(
        _pass2_kernel,
        out_shape=jax.ShapeDtypeStruct((M_PAD, CP), jnp.float32),
        grid=(n_tiles,),
        in_specs=[pl.BlockSpec((tile_m, CP), lambda i: (i, 0)),
                  pl.BlockSpec((1, CP), lambda i: (0, 0)),
                  pl.BlockSpec((1, CP), lambda i: (0, 0))],
        out_specs=pl.BlockSpec((tile_m, CP), lambda i: (i, 0)),
        compiler_params=cparams,
        cost_estimate=cost2,
    )(g, scale, shift)

    # Slice off row/channel padding, back to NCHW.
    # TODO(synk): fold this NHWC->NCHW transpose into pass 2 (in-kernel XLU
    # transpose into an (N, CP, Ho*Wo) output) to drop the trailing XLA pass.
    return out2d[:M, :Cout].reshape(N, Ho, Wo, Cout).transpose(0, 3, 1, 2)


def _reference(x, params, *, filter_size=3, stride=1, dilation=1):
    """Pure-JAX reference matching the PyTorch forward (train-mode BN)."""
    wf, bf, wm, bm, gamma, beta = (params[k] for k in
                                   ("wf", "bf", "wm", "bm", "gamma", "beta"))
    K = filter_size
    pad = int(dilation * (K - 1) / 2)
    x_pad = jnp.pad(x, ((0, 0), (0, 0), (pad, pad), (pad, pad)), mode="reflect")
    dn = lax.conv_dimension_numbers(x_pad.shape, wf.shape,
                                    ("NCHW", "OIHW", "NCHW"))

    def conv(w, b):
        y = lax.conv_general_dilated(
            x_pad, w, (stride, stride), "VALID",
            rhs_dilation=(dilation, dilation), dimension_numbers=dn,
            precision=lax.Precision.HIGHEST)
        return y + b[None, :, None, None]

    f = jax.nn.elu(conv(wf, bf))
    m = jax.nn.sigmoid(conv(wm, bm))
    g = f * m
    mean = g.mean(axis=(0, 2, 3), keepdims=True)
    var = ((g - mean) ** 2).mean(axis=(0, 2, 3), keepdims=True)
    return ((g - mean) / jnp.sqrt(var + BN_EPS)
            * gamma[None, :, None, None] + beta[None, :, None, None])


if __name__ == "__main__":
    # Small deterministic example consistent with the module's __init__.
    # W=12 gives M = 2*16*12 = 384; with tile_m=256 the grid has 2 tiles, so the
    # second tile exercises the padded-row masking in the BN statistics.
    N, Cin, H, W = 2, 4, 16, 12
    Cout, K = 8, 3

    key = jax.random.PRNGKey(0)
    k_x, k_wf, k_bf, k_wm, k_bm = jax.random.split(key, 5)
    fan_in = Cin * K * K
    bound = 1.0 / (fan_in ** 0.5)
    params = {
        # nn.Conv2d(in_features, out_features, 3) weights/biases (synthetic init)
        "wf": jax.random.uniform(k_wf, (Cout, Cin, K, K), jnp.float32, -bound, bound),
        "bf": jax.random.uniform(k_bf, (Cout,), jnp.float32, -bound, bound),
        "wm": jax.random.uniform(k_wm, (Cout, Cin, K, K), jnp.float32, -bound, bound),
        "bm": jax.random.uniform(k_bm, (Cout,), jnp.float32, -bound, bound),
        # BatchNorm2d affine params at their PyTorch init values
        "gamma": jnp.ones((Cout,), jnp.float32),
        "beta": jnp.zeros((Cout,), jnp.float32),
    }
    x = jax.random.normal(k_x, (N, Cin, H, W), dtype=jnp.float32)

    out = jax.block_until_ready(gated_conv2d(x, params, tile_m=256))
    ref = jax.block_until_ready(_reference(x, params))

    assert out.shape == (N, Cout, H, W), out.shape
    max_err = float(jnp.max(jnp.abs(out - ref)))
    # bf16 MXU operands and bf16 g stream (with f32 accumulation / f32 BN stats)
    # vs. an f32 HIGHEST reference on a unit-variance output: ~1e-2 abs error.
    assert max_err < 5e-2, f"max abs err = {max_err}"
    print("KERNEL_OK")
</pallas_src>

<mosaic_0001>
module attributes {stable_mosaic.version = 11 : i64} {
  func.func @_pass1_kernel(%arg0: i32, %arg1: memref<256x36xbf16, #tpu.memory_space<vmem>>, %arg2: memref<36x256xbf16, #tpu.memory_space<vmem>>, %arg3: memref<1x256xf32, #tpu.memory_space<vmem>>, %arg4: memref<256x128xbf16, #tpu.memory_space<vmem>>, %arg5: memref<8x128xf32, #tpu.memory_space<vmem>>) attributes {dimension_semantics = [#tpu.dimension_semantics<parallel>], iteration_bounds = array<i64: 2>, scalar_prefetch = 0 : i64, scratch_operands = 0 : i64, tpu.core_type = #tpu.core_type<tc>, window_params = [{transform_indices = @transform_0, window_bounds = array<i64: 256, 36>}, {pipeline_mode = #tpu.pipeline_mode<synchronous>, transform_indices = @transform_1, window_bounds = array<i64: 36, 256>}, {pipeline_mode = #tpu.pipeline_mode<synchronous>, transform_indices = @transform_2, window_bounds = array<i64: 1, 256>}, {transform_indices = @transform_3, window_bounds = array<i64: 256, 128>}, {transform_indices = @transform_4, window_bounds = array<i64: 8, 128>}]} {
    %c0 = arith.constant 0 : index
    %c0_0 = arith.constant 0 : index
    %0 = vector.load %arg1[%c0, %c0_0] : memref<256x36xbf16, #tpu.memory_space<vmem>>, vector<256x36xbf16>
    %c0_1 = arith.constant 0 : index
    %c0_2 = arith.constant 0 : index
    %1 = vector.load %arg2[%c0_1, %c0_2] : memref<36x256xbf16, #tpu.memory_space<vmem>>, vector<36x256xbf16>
    %cst = arith.constant dense<0.000000e+00> : vector<256x256xf32>
    %2 = tpu.matmul %0, %1, %cst {dimension_numbers = #tpu.dot_dimension_numbers<[1], [0], [0], [1], [0, 0, 1, 1], [], []>} : vector<256x36xbf16>, vector<36x256xbf16>, vector<256x256xf32> -> vector<256x256xf32>
    %c0_3 = arith.constant 0 : index
    %c0_4 = arith.constant 0 : index
    %3 = vector.load %arg3[%c0_3, %c0_4] : memref<1x256xf32, #tpu.memory_space<vmem>>, vector<1x256xf32>
    %4 = vector.broadcast %3 : vector<1x256xf32> to vector<256x256xf32>
    %5 = arith.addf %2, %4 : vector<256x256xf32>
    %6 = vector.extract_strided_slice %5 {offsets = [0, 0], sizes = [256, 128], strides = [1, 1]} : vector<256x256xf32> to vector<256x128xf32>
    %7 = vector.extract_strided_slice %5 {offsets = [0, 128], sizes = [256, 128], strides = [1, 1]} : vector<256x256xf32> to vector<256x128xf32>
    %cst_5 = arith.constant 0.000000e+00 : f32
    %8 = vector.broadcast %cst_5 : f32 to vector<256x128xf32>
    %9 = arith.cmpf ogt, %6, %8 : vector<256x128xf32>
    %cst_6 = arith.constant 0.000000e+00 : f32
    %10 = vector.broadcast %cst_6 : f32 to vector<256x128xf32>
    %11 = arith.minimumf %6, %10 : vector<256x128xf32>
    %12 = math.exp %11 : vector<256x128xf32>
    %cst_7 = arith.constant 1.000000e+00 : f32
    %13 = vector.broadcast %cst_7 : f32 to vector<256x128xf32>
    %14 = arith.subf %12, %13 : vector<256x128xf32>
    %15 = arith.select %9, %6, %14 : vector<256x128xi1>, vector<256x128xf32>
    %cst_8 = arith.constant 0.000000e+00 : f32
    %16 = vector.broadcast %cst_8 : f32 to vector<256x128xf32>
    %17 = arith.subf %16, %7 : vector<256x128xf32>
    %18 = math.exp %17 : vector<256x128xf32>
    %cst_9 = arith.constant 1.000000e+00 : f32
    %19 = vector.broadcast %cst_9 : f32 to vector<256x128xf32>
    %20 = arith.addf %19, %18 : vector<256x128xf32>
    %21 = tpu.reciprocal %20 : vector<256x128xf32> -> vector<256x128xf32>
    %22 = arith.mulf %15, %21 : vector<256x128xf32>
    %c256_i32 = arith.constant 256 : i32
    %23 = arith.muli %arg0, %c256_i32 : i32
    %24 = tpu.iota {dimensions = array<i32: 0>} : vector<256x1xi32>
    %25 = vector.broadcast %23 : i32 to vector<256x1xi32>
    %26 = arith.addi %25, %24 : vector<256x1xi32>
    %c384_i32 = arith.constant 384 : i32
    %27 = vector.broadcast %c384_i32 : i32 to vector<256x1xi32>
    %28 = arith.cmpi slt, %26, %27 : vector<256x1xi32>
    %29 = arith.extui %28 : vector<256x1xi1> to vector<256x1xi32>
    %30 = arith.sitofp %29 : vector<256x1xi32> to vector<256x1xf32>
    %31 = vector.broadcast %30 : vector<256x1xf32> to vector<256x128xf32>
    %32 = arith.mulf %22, %31 : vector<256x128xf32>
    %cst_10 = arith.constant dense<0.000000e+00> : vector<128xf32>
    %33 = vector.multi_reduction <add>, %32, %cst_10 [0] : vector<256x128xf32> to vector<128xf32>
    %34 = vector.shape_cast %33 : vector<128xf32> to vector<1x128xf32>
    %c0_11 = arith.constant 0 : index
    %c0_12 = arith.constant 0 : index
    %35 = vector.load %arg5[%c0_11, %c0_12] : memref<8x128xf32, #tpu.memory_space<vmem>>, vector<1x128xf32>
    tpu.vector_store %arg5[%c0_11, %c0_12], %34 {strides = array<i32>} : memref<8x128xf32, #tpu.memory_space<vmem>>, vector<1x128xf32>,
    %36 = arith.mulf %32, %22 : vector<256x128xf32>
    %cst_13 = arith.constant dense<0.000000e+00> : vector<128xf32>
    %37 = vector.multi_reduction <add>, %36, %cst_13 [0] : vector<256x128xf32> to vector<128xf32>
    %38 = vector.shape_cast %37 : vector<128xf32> to vector<1x128xf32>
    %c1 = arith.constant 1 : index
    %c0_14 = arith.constant 0 : index
    %39 = vector.load %arg5[%c1, %c0_14] : memref<8x128xf32, #tpu.memory_space<vmem>>, vector<1x128xf32>
    tpu.vector_store %arg5[%c1, %c0_14], %38 {strides = array<i32>} : memref<8x128xf32, #tpu.memory_space<vmem>>, vector<1x128xf32>,
    %40 = arith.truncf %22 : vector<256x128xf32> to vector<256x128xbf16>
    %c0_15 = arith.constant 0 : index
    %c0_16 = arith.constant 0 : index
    %41 = vector.load %arg4[%c0_15, %c0_16] : memref<256x128xbf16, #tpu.memory_space<vmem>>, vector<256x128xbf16>
    tpu.vector_store %arg4[%c0_15, %c0_16], %40 {strides = array<i32>} : memref<256x128xbf16, #tpu.memory_space<vmem>>, vector<256x128xbf16>,
    return
  }
  func.func @transform_0(%arg0: i32) -> (i32, i32) {
    %c0_i32 = arith.constant 0 : i32
    %c0_i32_0 = arith.constant 0 : i32
    return %arg0, %c0_i32 : i32, i32
  }
  func.func @transform_1(%arg0: i32) -> (i32, i32) {
    %c0_i32 = arith.constant 0 : i32
    %c0_i32_0 = arith.constant 0 : i32
    %c0_i32_1 = arith.constant 0 : i32
    return %c0_i32, %c0_i32_0 : i32, i32
  }
  func.func @transform_2(%arg0: i32) -> (i32, i32) {
    %c0_i32 = arith.constant 0 : i32
    %c0_i32_0 = arith.constant 0 : i32
    %c0_i32_1 = arith.constant 0 : i32
    return %c0_i32, %c0_i32_0 : i32, i32
  }
  func.func @transform_3(%arg0: i32) -> (i32, i32) {
    %c0_i32 = arith.constant 0 : i32
    %c0_i32_0 = arith.constant 0 : i32
    return %arg0, %c0_i32 : i32, i32
  }
  func.func @transform_4(%arg0: i32) -> (i32, i32) {
    %c0_i32 = arith.constant 0 : i32
    %c0_i32_0 = arith.constant 0 : i32
    return %arg0, %c0_i32 : i32, i32
  }
}

</mosaic_0001>

<llo_original>
// kernel: tpu_custom_call.1
$region0: #{tpu_custom_call.1}
  #allocation0 [shape = 'u32[]', space=smem, size = 0x4, offset = 0x4, fixed_abs, tag = 'smem constant byte address 0x4 - core index']
  #allocation1 [shape = 'u32[144,128]{1,0:T(1,128)}', space=vmem, size = 0x12000, scoped, tag = 'internal scratch']
  %s0 = inlined_call_operand.vmem [shape: bf16[512,36], index: 0, kind: input, shape index: {}]
  %s1 = inlined_call_operand.vmem [shape: bf16[36,256], index: 1, kind: input, shape index: {}]
  %s2 = inlined_call_operand.vmem [shape: f32[1,256], index: 2, kind: input, shape index: {}]
  %s3 = inlined_call_operand.hbm [shape: bf16[512,128], index: 3, kind: output, shape index: {0}]
  %s4 = inlined_call_operand.hbm [shape: f32[16,128], index: 4, kind: output, shape index: {1}]
  %5 = xla_tuple %s3, %s4
  %s6 = sld [smem:[#allocation0]]
  $region53: #{tpu_custom_call.1} parent=0
    _
  %s8 = ssub.s32 1, %s6
  %s9 = scalar_select 0, %s8, %s6
  $region1: #{tpu_custom_call.1} parent=0
    #allocation2 [shape = 'u8[131072]{0}', space=vmem, size = 0x20000, scoped, tag = 'output window, operand 0']
    #allocation3 [shape = 's32[2]{0}', space=sflag, size = 0x8, scoped, tag = 'scoped memory for tpu_custom_call.1']
    #allocation4 [shape = 'u8[8192]{0}', space=vmem, size = 0x2000, scoped, tag = 'output window, operand 1']
    #allocation5 [shape = 's32[2]{0}', space=sflag, size = 0x8, scoped, tag = 'scoped memory for tpu_custom_call.1']
    %10 = vsyncpa [#allocation3], 0
    %s11 = scalar_lea.sflag [#allocation3], 1
    %12 = vsyncpa %s11, 0
    %13 = vsyncpa [#allocation5], 0
    %s14 = scalar_lea.sflag [#allocation5], 1
    %15 = vsyncpa %s14, 0
    loop: start=0, step=1, limit=4
    $region2: #{tpu_custom_call.1} parent=1 // loop_pre_header
      _
    $region3: #{tpu_custom_call.1} parent=1 // loop_header
      %s17 = sphi 0, %s21
      %p18 = scmp.ge.s32.totalorder %s17, 4
      %s27 = sphi 0, %s29
      %s30 = sphi 0, %s27
      %s31 = sphi 0, %s30
      %s47 = sphi 0, %s31
      %s51 = sphi 0, %s51
      %s53 = sphi 0, %s51
      %s54 = sphi 0, %s53
      %s68 = sphi 0, %s54
      %s72 = sphi 0, %s72
      %s74 = sphi 0, %s72
      %s75 = sphi 0, %s74
      %s89 = sphi 0, %s75
      %s95 = sphi 0, %s97
      %s98 = sphi 0, %s95
      %s99 = sphi 0, %s98
      %s115 = sphi 0, %s99
      %s121 = sphi 0, %s123
      %s124 = sphi 0, %s121
      %s125 = sphi 0, %s124
      %s141 = sphi 0, %s125
    $region4: #{tpu_custom_call.1} parent=1 // loop_header_branch
      %20 = sbr.rel (%p18) target = $region8
    $region5: #{tpu_custom_call.1} parent=1 // loop_body
      %s22 = ssub.s32 %s17, 1
      %s23 = ssub.s32 %s17, 2
      %s24 = sadd.s32 %s17, 1
      %s25 = ssub.s32 %s17, %s24
      %p26 = scmp.eq.s32.totalorder %s25, 0
      %s28 = sadd.s32 %s27, 1
      %s29 = scalar_select %p26, %s27, %s28
      %p32 = pneg %p26
      %p33 = scmp.eq.s32.totalorder %s17, 1
      %p34 = por %p32, %p33
      %p35 = scmp.ne.s32.totalorder %s27, %s30
      %p36 = scmp.eq.s32.totalorder %s17, 0
      %p37 = por %p35, %p36
      %p38 = scmp.ne.s32.totalorder %s27, %s30
      %p39 = scmp.eq.s32.totalorder %s22, 1
      %p40 = por %p38, %p39
      %p41 = scmp.ne.s32.totalorder %s30, %s31
      %p42 = scmp.eq.s32.totalorder %s22, 0
      %p43 = por %p41, %p42
      %p44 = scmp.ne.s32.totalorder %s30, %s31
      %p45 = scmp.eq.s32.totalorder %s23, 1
      %p46 = por %p44, %p45
      %p48 = scmp.ne.s32.totalorder %s31, %s47
      %p49 = scmp.eq.s32.totalorder %s23, 0
      %p50 = por %p48, %p49
      %s52 = sadd.s32 %s51, 1
      %p55 = scmp.eq.s32.totalorder %s17, 1
      %p56 = scmp.ne.s32.totalorder %s51, %s53
      %p57 = scmp.eq.s32.totalorder %s17, 0
      %p58 = por %p56, %p57
      %p59 = scmp.ne.s32.totalorder %s51, %s53
      %p60 = scmp.eq.s32.totalorder %s22, 1
      %p61 = por %p59, %p60
      %p62 = scmp.ne.s32.totalorder %s53, %s54
      %p63 = scmp.eq.s32.totalorder %s22, 0
      %p64 = por %p62, %p63
      %p65 = scmp.ne.s32.totalorder %s53, %s54
      %p66 = scmp.eq.s32.totalorder %s23, 1
      %p67 = por %p65, %p66
      %p69 = scmp.ne.s32.totalorder %s54, %s68
      %p70 = scmp.eq.s32.totalorder %s23, 0
      %p71 = por %p69, %p70
      %s73 = sadd.s32 %s72, 1
      %p76 = scmp.eq.s32.totalorder %s17, 1
      %p77 = scmp.ne.s32.totalorder %s72, %s74
      %p78 = scmp.eq.s32.totalorder %s17, 0
      %p79 = por %p77, %p78
      %p80 = scmp.ne.s32.totalorder %s72, %s74
      %p81 = scmp.eq.s32.totalorder %s22, 1
      %p82 = por %p80, %p81
      %p83 = scmp.ne.s32.totalorder %s74, %s75
      %p84 = scmp.eq.s32.totalorder %s22, 0
      %p85 = por %p83, %p84
      %p86 = scmp.ne.s32.totalorder %s74, %s75
      %p87 = scmp.eq.s32.totalorder %s23, 1
      %p88 = por %p86, %p87
      %p90 = scmp.ne.s32.totalorder %s75, %s89
      %p91 = scmp.eq.s32.totalorder %s23, 0
      %p92 = por %p90, %p91
      %s93 = ssub.s32 %s17, %s24
      %p94 = scmp.eq.s32.totalorder %s93, 0
      %s96 = sadd.s32 %s95, 1
      %s97 = scalar_select %p94, %s95, %s96
      %p100 = pneg %p94
      %p101 = scmp.eq.s32.totalorder %s17, 1
      %p102 = por %p100, %p101
      %p103 = scmp.ne.s32.totalorder %s95, %s98
      %p104 = scmp.eq.s32.totalorder %s17, 0
      %p105 = por %p103, %p104
      %p106 = scmp.ne.s32.totalorder %s95, %s98
      %p107 = scmp.eq.s32.totalorder %s22, 1
      %p108 = por %p106, %p107
      %p109 = scmp.ne.s32.totalorder %s98, %s99
      %p110 = scmp.eq.s32.totalorder %s22, 0
      %p111 = por %p109, %p110
      %p112 = scmp.ne.s32.totalorder %s98, %s99
      %p113 = scmp.eq.s32.totalorder %s23, 1
      %p114 = por %p112, %p113
      %p116 = scmp.ne.s32.totalorder %s99, %s115
      %p117 = scmp.eq.s32.totalorder %s23, 0
      %p118 = por %p116, %p117
      %s119 = ssub.s32 %s17, %s24
      %p120 = scmp.eq.s32.totalorder %s119, 0
      %s122 = sadd.s32 %s121, 1
      %s123 = scalar_select %p120, %s121, %s122
      %p126 = pneg %p120
      %p127 = scmp.eq.s32.totalorder %s17, 1
      %p128 = por %p126, %p127
      %p129 = scmp.ne.s32.totalorder %s121, %s124
      %p130 = scmp.eq.s32.totalorder %s17, 0
      %p131 = por %p129, %p130
      %p132 = scmp.ne.s32.totalorder %s121, %s124
      %p133 = scmp.eq.s32.totalorder %s22, 1
      %p134 = por %p132, %p133
      %p135 = scmp.ne.s32.totalorder %s124, %s125
      %p136 = scmp.eq.s32.totalorder %s22, 0
      %p137 = por %p135, %p136
      %p138 = scmp.ne.s32.totalorder %s124, %s125
      %p139 = scmp.eq.s32.totalorder %s23, 1
      %p140 = por %p138, %p139
      %p142 = scmp.ne.s32.totalorder %s125, %s141
      %p143 = scmp.eq.s32.totalorder %s23, 0
      %p144 = por %p142, %p143
      %p145 = scmp.le.s32.totalorder 1, %s17
      %p146 = scmp.lt.s32.totalorder %s17, 3
      %p147 = pnand %p145, %p146
      %p148 = pneg %p147
      // Predicated region
      $region9: #{tpu_custom_call.1} parent=5 // pred_check
        _
      $region10: #{tpu_custom_call.1} parent=5 // pred_check_branch
        %150 = sbr.rel (%p147) target = $region12
      $region11: #{tpu_custom_call.1} parent=5 // pred_region
        %s151 = ssub.s32 %s17, 1
        // Predicated region
        $region13: #{tpu_custom_call.1} parent=11 // pred_check
          %p152 = pneg %p64
        $region14: #{tpu_custom_call.1} parent=11 // pred_check_branch
          %154 = sbr.rel (%p152) target = $region16
        $region15: #{tpu_custom_call.1} parent=11 // pred_region
          _
        $region16: #{tpu_custom_call.1} parent=11 // pred_fallthru
          _
        // Predicated region
        $region17: #{tpu_custom_call.1} parent=11 // pred_check
          %p155 = pneg %p85
        $region18: #{tpu_custom_call.1} parent=11 // pred_check_branch
          %157 = sbr.rel (%p155) target = $region20
        $region19: #{tpu_custom_call.1} parent=11 // pred_region
          _
        $region20: #{tpu_custom_call.1} parent=11 // pred_fallthru
          _
      $region12: #{tpu_custom_call.1} parent=5 // pred_fallthru
        _
      %p158 = scmp.lt.s32.totalorder %s17, 2
      // Predicated region
      $region21: #{tpu_custom_call.1} parent=5 // pred_check
        %p159 = pneg %p158
      $region22: #{tpu_custom_call.1} parent=5 // pred_check_branch
        %161 = sbr.rel (%p159) target = $region24
      $region23: #{tpu_custom_call.1} parent=5 // pred_region
        // Predicated region
        $region25: #{tpu_custom_call.1} parent=23 // pred_check
          %p162 = pneg %p37
        $region26: #{tpu_custom_call.1} parent=23 // pred_check_branch
          %164 = sbr.rel (%p162) target = $region28
        $region27: #{tpu_custom_call.1} parent=23 // pred_region
          %s165 = smul.u32 32, %s17
          %p166 = scmp.lt.s32.totalorder %s165, 63
          %s167 = scalar_select %p166, %s165, 63
          %s168 = smul.addr %s167, 4
          %s169 = scalar_lea.vmem %s0, %s168
          %s170 = smul.u32 32, %s17
        $region28: #{tpu_custom_call.1} parent=23 // pred_fallthru
          _
      $region24: #{tpu_custom_call.1} parent=5 // pred_fallthru
        _
      %p171 = scmp.le.s32.totalorder 1, %s17
      %p172 = scmp.lt.s32.totalorder %s17, 3
      %p173 = pnand %p171, %p172
      %p174 = pneg %p173
      // Predicated region
      $region29: #{tpu_custom_call.1} parent=5 // pred_check
        _
      $region30: #{tpu_custom_call.1} parent=5 // pred_check_branch
        %176 = sbr.rel (%p173) target = $region32
      $region31: #{tpu_custom_call.1} parent=5 // pred_region
        %s177 = ssub.s32 %s17, 1
        %s178 = smul.u32 32, %s22
        %p179 = scmp.lt.s32.totalorder %s178, 63
        %s180 = scalar_select %p179, %s178, 63
        %s181 = smul.addr %s180, 4
        %s182 = scalar_lea.vmem %s0, %s181
        %p183 = pneg %p43
        %p184 = pneg %p40
        %p185 = pneg %p64
        %p186 = pneg %p61
        %p187 = pneg %p85
        %p188 = pneg %p82
        %p189 = pneg %p111
        %p190 = pneg %p108
        %s191 = sand.u32 %s98, 1
        %s192 = scalar_lea.sflag [#allocation3], %s191
        %s193 = sand.u32 %s98, 1
        %s194 = smul.addr %s193, 128
        %s195 = scalar_lea.vmem [#allocation2], %s194
        %p196 = pneg %p137
        %p197 = pneg %p134
        %s198 = sand.u32 %s124, 1
        %s199 = scalar_lea.sflag [#allocation5], %s198
        %s200 = sand.u32 %s124, 1
        %s201 = smul.addr %s200, 8
        %s202 = scalar_lea.vmem [#allocation4], %s201
        %s203 = smul.u32 32, %s22
        %p204 = scmp.lt.s32.totalorder %s203, 63
        %s205 = scalar_select %p204, %s203, 63
        %s206 = smul.addr %s205, 4
        %s207 = scalar_lea.vmem %s0, %s206
        %s208 = smul.u32 32, %s22
        %s209 = smul.u32 32, %s22
        %v211 = vld [vmem:[%s207] sm:$0xf]
        %v212 = vld [vmem:[%s207 + $0x4] sm:$0xf]
        %v213 = vld [vmem:[%s207 + $0x8] sm:$0xf]
        %v214 = vld [vmem:[%s207 + $0xc] sm:$0xf]
        %v215 = vld [vmem:[%s207 + $0x10] sm:$0xf]
        %v216 = vld [vmem:[%s207 + $0x14] sm:$0xf]
        %v217 = vld [vmem:[%s207 + $0x18] sm:$0xf]
        %v218 = vld [vmem:[%s207 + $0x1c] sm:$0xf]
        %v219 = vld [vmem:[%s207 + $0x20] sm:$0xf]
        %v220 = vld [vmem:[%s207 + $0x24] sm:$0xf]
        %v221 = vld [vmem:[%s207 + $0x28] sm:$0xf]
        %v222 = vld [vmem:[%s207 + $0x2c] sm:$0xf]
        %v223 = vld [vmem:[%s207 + $0x30] sm:$0xf]
        %v224 = vld [vmem:[%s207 + $0x34] sm:$0xf]
        %v225 = vld [vmem:[%s207 + $0x38] sm:$0xf]
        %v226 = vld [vmem:[%s207 + $0x3c] sm:$0xf]
        %v227 = vld [vmem:[%s207 + $0x40] sm:$0xf]
        %v228 = vld [vmem:[%s207 + $0x44] sm:$0xf]
        %v229 = vld [vmem:[%s207 + $0x48] sm:$0xf]
        %v230 = vld [vmem:[%s207 + $0x4c] sm:$0xf]
        %v231 = vld [vmem:[%s207 + $0x50] sm:$0xf]
        %v232 = vld [vmem:[%s207 + $0x54] sm:$0xf]
        %v233 = vld [vmem:[%s207 + $0x58] sm:$0xf]
        %v234 = vld [vmem:[%s207 + $0x5c] sm:$0xf]
        %v235 = vld [vmem:[%s207 + $0x60] sm:$0xf]
        %v236 = vld [vmem:[%s207 + $0x64] sm:$0xf]
        %v237 = vld [vmem:[%s207 + $0x68] sm:$0xf]
        %v238 = vld [vmem:[%s207 + $0x6c] sm:$0xf]
        %v239 = vld [vmem:[%s207 + $0x70] sm:$0xf]
        %v240 = vld [vmem:[%s207 + $0x74] sm:$0xf]
        %v241 = vld [vmem:[%s207 + $0x78] sm:$0xf]
        %v242 = vld [vmem:[%s207 + $0x7c] sm:$0xf]
        %v243 = vld [vmem:[%s1] sm:$0xff]
        %v244 = vld [vmem:[%s1 + $0x8] sm:$0xff]
        %v245 = vld [vmem:[%s1 + $0x10] sm:$0xff]
        %v246 = vld [vmem:[%s1 + $0x18] sm:$0xff]
        %v247 = vld [vmem:[%s1 + $0x20] sm:$0x33]
        %v248 = vld [vmem:[%s2] sm:$0x3]
        %v250 = vlaneseq
        %v251 = vshrl.u32 %v250, 7
        %v252 = vsub.s32 0, %v251
        %v253 = vrot.slane %v248, %v252
        %v254 = vlaneseq
        %v255 = vshrl.u32 %v254, 7
        %v256 = vsub.s32 1, %v255
        %v257 = vrot.slane %v248, %v256
        %v292 = vunpack.c.l.b16 %v211
        %v293 = vunpack.c.l.b16 %v212
        %v294 = vunpack.c.l.b16 %v213
        %v295 = vunpack.c.l.b16 %v214
        %v296 = vunpack.c.l.b16 %v215
        %v297 = vunpack.c.l.b16 %v216
        %v298 = vunpack.c.l.b16 %v217
        %v299 = vunpack.c.l.b16 %v218
        %v300 = vunpack.c.l.b16 %v219
        %v301 = vunpack.c.l.b16 %v220
        %v302 = vunpack.c.l.b16 %v221
        %v303 = vunpack.c.l.b16 %v222
        %v304 = vunpack.c.l.b16 %v223
        %v305 = vunpack.c.l.b16 %v224
        %v306 = vunpack.c.l.b16 %v225
        %v307 = vunpack.c.l.b16 %v226
        %v308 = vunpack.c.l.b16 %v227
        %v309 = vunpack.c.l.b16 %v228
        %v310 = vunpack.c.l.b16 %v229
        %v311 = vunpack.c.l.b16 %v230
        %v312 = vunpack.c.l.b16 %v231
        %v313 = vunpack.c.l.b16 %v232
        %v314 = vunpack.c.l.b16 %v233
        %v315 = vunpack.c.l.b16 %v234
        %v316 = vunpack.c.l.b16 %v235
        %v317 = vunpack.c.l.b16 %v236
        %v318 = vunpack.c.l.b16 %v237
        %v319 = vunpack.c.l.b16 %v238
        %v320 = vunpack.c.l.b16 %v239
        %v321 = vunpack.c.l.b16 %v240
        %v322 = vunpack.c.l.b16 %v241
        %v323 = vunpack.c.l.b16 %v242
        %v324 = vpack.c.b16 %v293, %v292
        %v325 = vpack.c.b16 %v295, %v294
        %v326 = vpack.c.b16 %v297, %v296
        %v327 = vpack.c.b16 %v299, %v298
        %v328 = vpack.c.b16 %v301, %v300
        %v329 = vpack.c.b16 %v303, %v302
        %v330 = vpack.c.b16 %v305, %v304
        %v331 = vpack.c.b16 %v307, %v306
        %v332 = vpack.c.b16 %v309, %v308
        %v333 = vpack.c.b16 %v311, %v310
        %v334 = vpack.c.b16 %v313, %v312
        %v335 = vpack.c.b16 %v315, %v314
        %v336 = vpack.c.b16 %v317, %v316
        %v337 = vpack.c.b16 %v319, %v318
        %v338 = vpack.c.b16 %v321, %v320
        %v339 = vpack.c.b16 %v323, %v322
        %v345 = vunpack.c.l.b16 %v243
        %v346 = vunpack.c.h.b16 %v243
        %v347 = vunpack.c.l.b16 %v244
        %v348 = vunpack.c.h.b16 %v244
        %v349 = vunpack.c.l.b16 %v245
        %v350 = vunpack.c.h.b16 %v245
        %v351 = vunpack.c.l.b16 %v246
        %v352 = vunpack.c.h.b16 %v246
        %v353 = vunpack.c.l.b16 %v247
        %v354 = vunpack.c.h.b16 %v247
        %v355 = vpack.c.b16 %v347, %v345
        %v356 = vpack.c.b16 %v348, %v346
        %v357 = vpack.c.b16 %v351, %v349
        %v358 = vpack.c.b16 %v352, %v350
        %v359 = vpack.c.b16 %v353, %v353
        %v360 = vpack.c.b16 %v354, %v354
        %vm365 = vcmask 293888
        %v367 = vsel %vm365, %v324, 0
        %v370 = vsel %vm365, %v325, 0
        %v373 = vsel %vm365, %v326, 0
        %v376 = vsel %vm365, %v327, 0
        %v379 = vsel %vm365, %v328, 0
        %v382 = vsel %vm365, %v329, 0
        %v385 = vsel %vm365, %v330, 0
        %v388 = vsel %vm365, %v331, 0
        %v391 = vsel %vm365, %v332, 0
        %v394 = vsel %vm365, %v333, 0
        %v397 = vsel %vm365, %v334, 0
        %v400 = vsel %vm365, %v335, 0
        %v403 = vsel %vm365, %v336, 0
        %v406 = vsel %vm365, %v337, 0
        %v409 = vsel %vm365, %v338, 0
        %v412 = vsel %vm365, %v339, 0
        %vm414 = vcmask 1041408
        %v416 = vsel %vm414, %v359, 0
        %v419 = vsel %vm414, %v360, 0
        %421 = vmatprep.subr.bf16.mxu0 0
        %422 = vmatpush1.bf16.msra.mxu0 0
        %423 = vmatprep.subr.bf16.mxu0 0
        %424 = vmatpush1.bf16.msra.mxu0 0
        %425 = vmatprep.subr.bf16.mxu0 0
        %426 = vmatpush1.bf16.msra.mxu0 0
        %427 = vmatprep.subr.bf16.mxu0 0
        %428 = vmatpush1.bf16.msra.mxu0 0
        %429 = vmatprep.subr.bf16.mxu0 0
        %430 = vmatpush1.bf16.msra.mxu0 0
        %431 = vmatprep.subr.bf16.mxu0 %v419
        %432 = vmatpush1.bf16.msra.mxu0 %v416
        %433 = vmatprep.subr.bf16.mxu0 %v358
        %434 = vmatpush1.bf16.msra.mxu0 %v357
        %435 = vmatprep.subr.bf16.mxu0 %v356
        %436 = vmatpush1.bf16.msra.mxu0 %v355
        %437 = vmatprep.subr.bf16.mxu0 0
        %438 = vmatpush2.bf16.msra.mxu0 0
        %439 = vmatprep.subr.bf16.mxu0 0
        %440 = vmatpush2.bf16.msra.mxu0 0
        %441 = vmatprep.subr.bf16.mxu0 0
        %442 = vmatpush2.bf16.msra.mxu0 0
        %443 = vmatprep.subr.bf16.mxu0 0
        %444 = vmatpush2.bf16.msra.mxu0 0
        %445 = vmatprep.subr.bf16.mxu0 0
        %446 = vmatpush2.bf16.msra.mxu0 0
        %447 = vmatprep.subr.bf16.mxu0 0
        %448 = vmatpush2.bf16.msra.mxu0 0
        %449 = vmatprep.subr.bf16.mxu0 0
        %450 = vmatpush2.bf16.msra.mxu0 0
        %451 = vmatprep.subr.bf16.mxu0 0
        %452 = vmatpush2.bf16.msra.mxu0 0
        %453 = vmatprep.mubr.bf16.mxu0 0
        %454 = vmatmul.mubr.bf16.gmra.mxu0 %v367
        %v455 = vpop.f32.mrf.mxu0
        %v456 = vadd.f32 %v253, %v455
        %v457 = vpop.f32.mrf.mxu0
        %v458 = vadd.f32 %v257, %v457
        %v459 = vpop.f32.mrf.mxu0
        %v460 = vadd.f32 %v253, %v459
        %v461 = vpop.f32.mrf.mxu0
        %v462 = vadd.f32 %v257, %v461
        %463 = vmatprep.mubr.bf16.mxu0 0
        %464 = vmatmul.mubr.bf16.gmra.mxu0 %v370
        %v465 = vpop.f32.mrf.mxu0
        %v466 = vadd.f32 %v253, %v465
        %v467 = vpop.f32.mrf.mxu0
        %v468 = vadd.f32 %v257, %v467
        %v469 = vpop.f32.mrf.mxu0
        %v470 = vadd.f32 %v253, %v469
        %v471 = vpop.f32.mrf.mxu0
        %v472 = vadd.f32 %v257, %v471
        %473 = vmatprep.mubr.bf16.mxu0 0
        %474 = vmatmul.mubr.bf16.gmra.mxu0 %v373
        %v475 = vpop.f32.mrf.mxu0
        %v476 = vadd.f32 %v253, %v475
        %v477 = vpop.f32.mrf.mxu0
        %v478 = vadd.f32 %v257, %v477
        %v479 = vpop.f32.mrf.mxu0
        %v480 = vadd.f32 %v253, %v479
        %v481 = vpop.f32.mrf.mxu0
        %v482 = vadd.f32 %v257, %v481
        %483 = vmatprep.mubr.bf16.mxu0 0
        %484 = vmatmul.mubr.bf16.gmra.mxu0 %v376
        %v485 = vpop.f32.mrf.mxu0
        %v486 = vadd.f32 %v253, %v485
        %v487 = vpop.f32.mrf.mxu0
        %v488 = vadd.f32 %v257, %v487
        %v489 = vpop.f32.mrf.mxu0
        %v490 = vadd.f32 %v253, %v489
        %v491 = vpop.f32.mrf.mxu0
        %v492 = vadd.f32 %v257, %v491
        %493 = vmatprep.mubr.bf16.mxu0 0
        %494 = vmatmul.mubr.bf16.gmra.mxu0 %v379
        %v495 = vpop.f32.mrf.mxu0
        %v496 = vadd.f32 %v253, %v495
        %v497 = vpop.f32.mrf.mxu0
        %v498 = vadd.f32 %v257, %v497
        %v499 = vpop.f32.mrf.mxu0
        %v500 = vadd.f32 %v253, %v499
        %v501 = vpop.f32.mrf.mxu0
        %v502 = vadd.f32 %v257, %v501
        %503 = vmatprep.mubr.bf16.mxu0 0
        %504 = vmatmul.mubr.bf16.gmra.mxu0 %v382
        %v505 = vpop.f32.mrf.mxu0
        %v506 = vadd.f32 %v253, %v505
        %v507 = vpop.f32.mrf.mxu0
        %v508 = vadd.f32 %v257, %v507
        %v509 = vpop.f32.mrf.mxu0
        %v510 = vadd.f32 %v253, %v509
        %v511 = vpop.f32.mrf.mxu0
        %v512 = vadd.f32 %v257, %v511
        %513 = vmatprep.mubr.bf16.mxu0 0
        %514 = vmatmul.mubr.bf16.gmra.mxu0 %v385
        %v515 = vpop.f32.mrf.mxu0
        %v516 = vadd.f32 %v253, %v515
        %v517 = vpop.f32.mrf.mxu0
        %v518 = vadd.f32 %v257, %v517
        %v519 = vpop.f32.mrf.mxu0
        %v520 = vadd.f32 %v253, %v519
        %v521 = vpop.f32.mrf.mxu0
        %v522 = vadd.f32 %v257, %v521
        %523 = vmatprep.mubr.bf16.mxu0 0
        %524 = vmatmul.mubr.bf16.gmra.mxu0 %v388
        %v525 = vpop.f32.mrf.mxu0
        %v526 = vadd.f32 %v253, %v525
        %v527 = vpop.f32.mrf.mxu0
        %v528 = vadd.f32 %v257, %v527
        %v529 = vpop.f32.mrf.mxu0
        %v530 = vadd.f32 %v253, %v529
        %v531 = vpop.f32.mrf.mxu0
        %v532 = vadd.f32 %v257, %v531
        %533 = vmatprep.mubr.bf16.mxu0 0
        %534 = vmatmul.mubr.bf16.gmra.mxu0 %v391
        %v535 = vpop.f32.mrf.mxu0
        %v536 = vadd.f32 %v253, %v535
        %v537 = vpop.f32.mrf.mxu0
        %v538 = vadd.f32 %v257, %v537
        %v539 = vpop.f32.mrf.mxu0
        %v540 = vadd.f32 %v253, %v539
        %v541 = vpop.f32.mrf.mxu0
        %v542 = vadd.f32 %v257, %v541
        %543 = vmatprep.mubr.bf16.mxu0 0
        %544 = vmatmul.mubr.bf16.gmra.mxu0 %v394
        %v545 = vpop.f32.mrf.mxu0
        %v546 = vadd.f32 %v253, %v545
        %v547 = vpop.f32.mrf.mxu0
        %v548 = vadd.f32 %v257, %v547
        %v549 = vpop.f32.mrf.mxu0
        %v550 = vadd.f32 %v253, %v549
        %v551 = vpop.f32.mrf.mxu0
        %v552 = vadd.f32 %v257, %v551
        %553 = vmatprep.mubr.bf16.mxu0 0
        %554 = vmatmul.mubr.bf16.gmra.mxu0 %v397
        %v555 = vpop.f32.mrf.mxu0
        %v556 = vadd.f32 %v253, %v555
        %v557 = vpop.f32.mrf.mxu0
        %v558 = vadd.f32 %v257, %v557
        %v559 = vpop.f32.mrf.mxu0
        %v560 = vadd.f32 %v253, %v559
        %v561 = vpop.f32.mrf.mxu0
        %v562 = vadd.f32 %v257, %v561
        %563 = vmatprep.mubr.bf16.mxu0 0
        %564 = vmatmul.mubr.bf16.gmra.mxu0 %v400
        %v565 = vpop.f32.mrf.mxu0
        %v566 = vadd.f32 %v253, %v565
        %v567 = vpop.f32.mrf.mxu0
        %v568 = vadd.f32 %v257, %v567
        %v569 = vpop.f32.mrf.mxu0
        %v570 = vadd.f32 %v253, %v569
        %v571 = vpop.f32.mrf.mxu0
        %v572 = vadd.f32 %v257, %v571
        %573 = vmatprep.mubr.bf16.mxu0 0
        %574 = vmatmul.mubr.bf16.gmra.mxu0 %v403
        %v575 = vpop.f32.mrf.mxu0
        %v576 = vadd.f32 %v253, %v575
        %v577 = vpop.f32.mrf.mxu0
        %v578 = vadd.f32 %v257, %v577
        %v579 = vpop.f32.mrf.mxu0
        %v580 = vadd.f32 %v253, %v579
        %v581 = vpop.f32.mrf.mxu0
        %v582 = vadd.f32 %v257, %v581
        %583 = vmatprep.mubr.bf16.mxu0 0
        %584 = vmatmul.mubr.bf16.gmra.mxu0 %v406
        %v585 = vpop.f32.mrf.mxu0
        %v586 = vadd.f32 %v253, %v585
        %v587 = vpop.f32.mrf.mxu0
        %v588 = vadd.f32 %v257, %v587
        %v589 = vpop.f32.mrf.mxu0
        %v590 = vadd.f32 %v253, %v589
        %v591 = vpop.f32.mrf.mxu0
        %v592 = vadd.f32 %v257, %v591
        %593 = vmatprep.mubr.bf16.mxu0 0
        %594 = vmatmul.mubr.bf16.gmra.mxu0 %v409
        %v595 = vpop.f32.mrf.mxu0
        %v596 = vadd.f32 %v253, %v595
        %v597 = vpop.f32.mrf.mxu0
        %v598 = vadd.f32 %v257, %v597
        %v599 = vpop.f32.mrf.mxu0
        %v600 = vadd.f32 %v253, %v599
        %v601 = vpop.f32.mrf.mxu0
        %v602 = vadd.f32 %v257, %v601
        %603 = vmatprep.mubr.bf16.mxu0 0
        %604 = vmatmul.mubr.bf16.gmra.mxu0 %v412
        %v605 = vpop.f32.mrf.mxu0
        %v606 = vadd.f32 %v253, %v605
        %v607 = vpop.f32.mrf.mxu0
        %v608 = vadd.f32 %v257, %v607
        %v609 = vpop.f32.mrf.mxu0
        %v610 = vadd.f32 %v253, %v609
        %v611 = vpop.f32.mrf.mxu0
        %v612 = vadd.f32 %v257, %v611
        %613 = vdwg.mxu0
        %vm614 = vcmp.gt.f32.partialorder %v456, 0.0
        %vm615 = vcmp.gt.f32.partialorder %v460, 0.0
        %vm616 = vcmp.gt.f32.partialorder %v466, 0.0
        %vm617 = vcmp.gt.f32.partialorder %v470, 0.0
        %vm618 = vcmp.gt.f32.partialorder %v476, 0.0
        %vm619 = vcmp.gt.f32.partialorder %v480, 0.0
        %vm620 = vcmp.gt.f32.partialorder %v486, 0.0
        %vm621 = vcmp.gt.f32.partialorder %v490, 0.0
        %vm622 = vcmp.gt.f32.partialorder %v496, 0.0
        %vm623 = vcmp.gt.f32.partialorder %v500, 0.0
        %vm624 = vcmp.gt.f32.partialorder %v506, 0.0
        %vm625 = vcmp.gt.f32.partialorder %v510, 0.0
        %vm626 = vcmp.gt.f32.partialorder %v516, 0.0
        %vm627 = vcmp.gt.f32.partialorder %v520, 0.0
        %vm628 = vcmp.gt.f32.partialorder %v526, 0.0
        %vm629 = vcmp.gt.f32.partialorder %v530, 0.0
        %vm630 = vcmp.gt.f32.partialorder %v536, 0.0
        %vm631 = vcmp.gt.f32.partialorder %v540, 0.0
        %vm632 = vcmp.gt.f32.partialorder %v546, 0.0
        %vm633 = vcmp.gt.f32.partialorder %v550, 0.0
        %vm634 = vcmp.gt.f32.partialorder %v556, 0.0
        %vm635 = vcmp.gt.f32.partialorder %v560, 0.0
        %vm636 = vcmp.gt.f32.partialorder %v566, 0.0
        %vm637 = vcmp.gt.f32.partialorder %v570, 0.0
        %vm638 = vcmp.gt.f32.partialorder %v576, 0.0
        %vm639 = vcmp.gt.f32.partialorder %v580, 0.0
        %vm640 = vcmp.gt.f32.partialorder %v586, 0.0
        %vm641 = vcmp.gt.f32.partialorder %v590, 0.0
        %vm642 = vcmp.gt.f32.partialorder %v596, 0.0
        %vm643 = vcmp.gt.f32.partialorder %v600, 0.0
        %vm644 = vcmp.gt.f32.partialorder %v606, 0.0
        %vm645 = vcmp.gt.f32.partialorder %v610, 0.0
        %v646 = vmin.f32 %v456, 0.0
        %v647 = vmin.f32 %v460, 0.0
        %v648 = vmin.f32 %v466, 0.0
        %v649 = vmin.f32 %v470, 0.0
        %v650 = vmin.f32 %v476, 0.0
        %v651 = vmin.f32 %v480, 0.0
        %v652 = vmin.f32 %v486, 0.0
        %v653 = vmin.f32 %v490, 0.0
        %v654 = vmin.f32 %v496, 0.0
        %v655 = vmin.f32 %v500, 0.0
        %v656 = vmin.f32 %v506, 0.0
        %v657 = vmin.f32 %v510, 0.0
        %v658 = vmin.f32 %v516, 0.0
        %v659 = vmin.f32 %v520, 0.0
        %v660 = vmin.f32 %v526, 0.0
        %v661 = vmin.f32 %v530, 0.0
        %v662 = vmin.f32 %v536, 0.0
        %v663 = vmin.f32 %v540, 0.0
        %v664 = vmin.f32 %v546, 0.0
        %v665 = vmin.f32 %v550, 0.0
        %v666 = vmin.f32 %v556, 0.0
        %v667 = vmin.f32 %v560, 0.0
        %v668 = vmin.f32 %v566, 0.0
        %v669 = vmin.f32 %v570, 0.0
        %v670 = vmin.f32 %v576, 0.0
        %v671 = vmin.f32 %v580, 0.0
        %v672 = vmin.f32 %v586, 0.0
        %v673 = vmin.f32 %v590, 0.0
        %v674 = vmin.f32 %v596, 0.0
        %v675 = vmin.f32 %v600, 0.0
        %v676 = vmin.f32 %v606, 0.0
        %v677 = vmin.f32 %v610, 0.0
        %v678 = vmul.f32 %v646, 1.442695
        %v679 = vpow.pop %v678
        %v680 = vmul.f32 %v647, 1.442695
        %v681 = vpow.pop %v680
        %v682 = vmul.f32 %v648, 1.442695
        %v683 = vpow.pop %v682
        %v684 = vmul.f32 %v649, 1.442695
        %v685 = vpow.pop %v684
        %v686 = vmul.f32 %v650, 1.442695
        %v687 = vpow.pop %v686
        %v688 = vmul.f32 %v651, 1.442695
        %v689 = vpow.pop %v688
        %v690 = vmul.f32 %v652, 1.442695
        %v691 = vpow.pop %v690
        %v692 = vmul.f32 %v653, 1.442695
        %v693 = vpow.pop %v692
        %v694 = vmul.f32 %v654, 1.442695
        %v695 = vpow.pop %v694
        %v696 = vmul.f32 %v655, 1.442695
        %v697 = vpow.pop %v696
        %v698 = vmul.f32 %v656, 1.442695
        %v699 = vpow.pop %v698
        %v700 = vmul.f32 %v657, 1.442695
        %v701 = vpow.pop %v700
        %v702 = vmul.f32 %v658, 1.442695
        %v703 = vpow.pop %v702
        %v704 = vmul.f32 %v659, 1.442695
        %v705 = vpow.pop %v704
        %v706 = vmul.f32 %v660, 1.442695
        %v707 = vpow.pop %v706
        %v708 = vmul.f32 %v661, 1.442695
        %v709 = vpow.pop %v708
        %v710 = vmul.f32 %v662, 1.442695
        %v711 = vpow.pop %v710
        %v712 = vmul.f32 %v663, 1.442695
        %v713 = vpow.pop %v712
        %v714 = vmul.f32 %v664, 1.442695
        %v715 = vpow.pop %v714
        %v716 = vmul.f32 %v665, 1.442695
        %v717 = vpow.pop %v716
        %v718 = vmul.f32 %v666, 1.442695
        %v719 = vpow.pop %v718
        %v720 = vmul.f32 %v667, 1.442695
        %v721 = vpow.pop %v720
        %v722 = vmul.f32 %v668, 1.442695
        %v723 = vpow.pop %v722
        %v724 = vmul.f32 %v669, 1.442695
        %v725 = vpow.pop %v724
        %v726 = vmul.f32 %v670, 1.442695
        %v727 = vpow.pop %v726
        %v728 = vmul.f32 %v671, 1.442695
        %v729 = vpow.pop %v728
        %v730 = vmul.f32 %v672, 1.442695
        %v731 = vpow.pop %v730
        %v732 = vmul.f32 %v673, 1.442695
        %v733 = vpow.pop %v732
        %v734 = vmul.f32 %v674, 1.442695
        %v735 = vpow.pop %v734
        %v736 = vmul.f32 %v675, 1.442695
        %v737 = vpow.pop %v736
        %v738 = vmul.f32 %v676, 1.442695
        %v739 = vpow.pop %v738
        %v740 = vmul.f32 %v677, 1.442695
        %v741 = vpow.pop %v740
        %v742 = vsub.f32 %v679, 1.0
        %v743 = vsub.f32 %v681, 1.0
        %v744 = vsub.f32 %v683, 1.0
        %v745 = vsub.f32 %v685, 1.0
        %v746 = vsub.f32 %v687, 1.0
        %v747 = vsub.f32 %v689, 1.0
        %v748 = vsub.f32 %v691, 1.0
        %v749 = vsub.f32 %v693, 1.0
        %v750 = vsub.f32 %v695, 1.0
        %v751 = vsub.f32 %v697, 1.0
        %v752 = vsub.f32 %v699, 1.0
        %v753 = vsub.f32 %v701, 1.0
        %v754 = vsub.f32 %v703, 1.0
        %v755 = vsub.f32 %v705, 1.0
        %v756 = vsub.f32 %v707, 1.0
        %v757 = vsub.f32 %v709, 1.0
        %v758 = vsub.f32 %v711, 1.0
        %v759 = vsub.f32 %v713, 1.0
        %v760 = vsub.f32 %v715, 1.0
        %v761 = vsub.f32 %v717, 1.0
        %v762 = vsub.f32 %v719, 1.0
        %v763 = vsub.f32 %v721, 1.0
        %v764 = vsub.f32 %v723, 1.0
        %v765 = vsub.f32 %v725, 1.0
        %v766 = vsub.f32 %v727, 1.0
        %v767 = vsub.f32 %v729, 1.0
        %v768 = vsub.f32 %v731, 1.0
        %v769 = vsub.f32 %v733, 1.0
        %v770 = vsub.f32 %v735, 1.0
        %v771 = vsub.f32 %v737, 1.0
        %v772 = vsub.f32 %v739, 1.0
        %v773 = vsub.f32 %v741, 1.0
        %v774 = vsel %vm614, %v456, %v742
        %v775 = vsel %vm615, %v460, %v743
        %v776 = vsel %vm616, %v466, %v744
        %v777 = vsel %vm617, %v470, %v745
        %v778 = vsel %vm618, %v476, %v746
        %v779 = vsel %vm619, %v480, %v747
        %v780 = vsel %vm620, %v486, %v748
        %v781 = vsel %vm621, %v490, %v749
        %v782 = vsel %vm622, %v496, %v750
        %v783 = vsel %vm623, %v500, %v751
        %v784 = vsel %vm624, %v506, %v752
        %v785 = vsel %vm625, %v510, %v753
        %v786 = vsel %vm626, %v516, %v754
        %v787 = vsel %vm627, %v520, %v755
        %v788 = vsel %vm628, %v526, %v756
        %v789 = vsel %vm629, %v530, %v757
        %v790 = vsel %vm630, %v536, %v758
        %v791 = vsel %vm631, %v540, %v759
        %v792 = vsel %vm632, %v546, %v760
        %v793 = vsel %vm633, %v550, %v761
        %v794 = vsel %vm634, %v556, %v762
        %v795 = vsel %vm635, %v560, %v763
        %v796 = vsel %vm636, %v566, %v764
        %v797 = vsel %vm637, %v570, %v765
        %v798 = vsel %vm638, %v576, %v766
        %v799 = vsel %vm639, %v580, %v767
        %v800 = vsel %vm640, %v586, %v768
        %v801 = vsel %vm641, %v590, %v769
        %v802 = vsel %vm642, %v596, %v770
        %v803 = vsel %vm643, %v600, %v771
        %v804 = vsel %vm644, %v606, %v772
        %v805 = vsel %vm645, %v610, %v773
        %v806 = vsub.f32 0.0, %v458
        %v807 = vsub.f32 0.0, %v462
        %v808 = vsub.f32 0.0, %v468
        %v809 = vsub.f32 0.0, %v472
        %v810 = vsub.f32 0.0, %v478
        %v811 = vsub.f32 0.0, %v482
        %v812 = vsub.f32 0.0, %v488
        %v813 = vsub.f32 0.0, %v492
        %v814 = vsub.f32 0.0, %v498
        %v815 = vsub.f32 0.0, %v502
        %v816 = vsub.f32 0.0, %v508
        %v817 = vsub.f32 0.0, %v512
        %v818 = vsub.f32 0.0, %v518
        %v819 = vsub.f32 0.0, %v522
        %v820 = vsub.f32 0.0, %v528
        %v821 = vsub.f32 0.0, %v532
        %v822 = vsub.f32 0.0, %v538
        %v823 = vsub.f32 0.0, %v542
        %v824 = vsub.f32 0.0, %v548
        %v825 = vsub.f32 0.0, %v552
        %v826 = vsub.f32 0.0, %v558
        %v827 = vsub.f32 0.0, %v562
        %v828 = vsub.f32 0.0, %v568
        %v829 = vsub.f32 0.0, %v572
        %v830 = vsub.f32 0.0, %v578
        %v831 = vsub.f32 0.0, %v582
        %v832 = vsub.f32 0.0, %v588
        %v833 = vsub.f32 0.0, %v592
        %v834 = vsub.f32 0.0, %v598
        %v835 = vsub.f32 0.0, %v602
        %v836 = vsub.f32 0.0, %v608
        %v837 = vsub.f32 0.0, %v612
        %v838 = vmul.f32 %v806, 1.442695
        %v839 = vpow.pop %v838
        %v840 = vmul.f32 %v807, 1.442695
        %v841 = vpow.pop %v840
        %v842 = vmul.f32 %v808, 1.442695
        %v843 = vpow.pop %v842
        %v844 = vmul.f32 %v809, 1.442695
        %v845 = vpow.pop %v844
        %v846 = vmul.f32 %v810, 1.442695
        %v847 = vpow.pop %v846
        %v848 = vmul.f32 %v811, 1.442695
        %v849 = vpow.pop %v848
        %v850 = vmul.f32 %v812, 1.442695
        %v851 = vpow.pop %v850
        %v852 = vmul.f32 %v813, 1.442695
        %v853 = vpow.pop %v852
        %v854 = vmul.f32 %v814, 1.442695
        %v855 = vpow.pop %v854
        %v856 = vmul.f32 %v815, 1.442695
        %v857 = vpow.pop %v856
        %v858 = vmul.f32 %v816, 1.442695
        %v859 = vpow.pop %v858
        %v860 = vmul.f32 %v817, 1.442695
        %v861 = vpow.pop %v860
        %v862 = vmul.f32 %v818, 1.442695
        %v863 = vpow.pop %v862
        %v864 = vmul.f32 %v819, 1.442695
        %v865 = vpow.pop %v864
        %v866 = vmul.f32 %v820, 1.442695
        %v867 = vpow.pop %v866
        %v868 = vmul.f32 %v821, 1.442695
        %v869 = vpow.pop %v868
        %v870 = vmul.f32 %v822, 1.442695
        %v871 = vpow.pop %v870
        %v872 = vmul.f32 %v823, 1.442695
        %v873 = vpow.pop %v872
        %v874 = vmul.f32 %v824, 1.442695
        %v875 = vpow.pop %v874
        %v876 = vmul.f32 %v825, 1.442695
        %v877 = vpow.pop %v876
        %v878 = vmul.f32 %v826, 1.442695
        %v879 = vpow.pop %v878
        %v880 = vmul.f32 %v827, 1.442695
        %v881 = vpow.pop %v880
        %v882 = vmul.f32 %v828, 1.442695
        %v883 = vpow.pop %v882
        %v884 = vmul.f32 %v829, 1.442695
        %v885 = vpow.pop %v884
        %v886 = vmul.f32 %v830, 1.442695
        %v887 = vpow.pop %v886
        %v888 = vmul.f32 %v831, 1.442695
        %v889 = vpow.pop %v888
        %v890 = vmul.f32 %v832, 1.442695
        %v891 = vpow.pop %v890
        %v892 = vmul.f32 %v833, 1.442695
        %v893 = vpow.pop %v892
        %v894 = vmul.f32 %v834, 1.442695
        %v895 = vpow.pop %v894
        %v896 = vmul.f32 %v835, 1.442695
        %v897 = vpow.pop %v896
        %v898 = vmul.f32 %v836, 1.442695
        %v899 = vpow.pop %v898
        %v900 = vmul.f32 %v837, 1.442695
        %v901 = vpow.pop %v900
        %v902 = vadd.f32 %v839, 1.0
        %v903 = vadd.f32 %v841, 1.0
        %v904 = vadd.f32 %v843, 1.0
        %v905 = vadd.f32 %v845, 1.0
        %v906 = vadd.f32 %v847, 1.0
        %v907 = vadd.f32 %v849, 1.0
        %v908 = vadd.f32 %v851, 1.0
        %v909 = vadd.f32 %v853, 1.0
        %v910 = vadd.f32 %v855, 1.0
        %v911 = vadd.f32 %v857, 1.0
        %v912 = vadd.f32 %v859, 1.0
        %v913 = vadd.f32 %v861, 1.0
        %v914 = vadd.f32 %v863, 1.0
        %v915 = vadd.f32 %v865, 1.0
        %v916 = vadd.f32 %v867, 1.0
        %v917 = vadd.f32 %v869, 1.0
        %v918 = vadd.f32 %v871, 1.0
        %v919 = vadd.f32 %v873, 1.0
        %v920 = vadd.f32 %v875, 1.0
        %v921 = vadd.f32 %v877, 1.0
        %v922 = vadd.f32 %v879, 1.0
        %v923 = vadd.f32 %v881, 1.0
        %v924 = vadd.f32 %v883, 1.0
        %v925 = vadd.f32 %v885, 1.0
        %v926 = vadd.f32 %v887, 1.0
        %v927 = vadd.f32 %v889, 1.0
        %v928 = vadd.f32 %v891, 1.0
        %v929 = vadd.f32 %v893, 1.0
        %v930 = vadd.f32 %v895, 1.0
        %v931 = vadd.f32 %v897, 1.0
        %v932 = vadd.f32 %v899, 1.0
        %v933 = vadd.f32 %v901, 1.0
        %v934 = vrcp.pop %v902
        %v935 = vrcp.pop %v903
        %v936 = vrcp.pop %v904
        %v937 = vrcp.pop %v905
        %v938 = vrcp.pop %v906
        %v939 = vrcp.pop %v907
        %v940 = vrcp.pop %v908
        %v941 = vrcp.pop %v909
        %v942 = vrcp.pop %v910
        %v943 = vrcp.pop %v911
        %v944 = vrcp.pop %v912
        %v945 = vrcp.pop %v913
        %v946 = vrcp.pop %v914
        %v947 = vrcp.pop %v915
        %v948 = vrcp.pop %v916
        %v949 = vrcp.pop %v917
        %v950 = vrcp.pop %v918
        %v951 = vrcp.pop %v919
        %v952 = vrcp.pop %v920
        %v953 = vrcp.pop %v921
        %v954 = vrcp.pop %v922
        %v955 = vrcp.pop %v923
        %v956 = vrcp.pop %v924
        %v957 = vrcp.pop %v925
        %v958 = vrcp.pop %v926
        %v959 = vrcp.pop %v927
        %v960 = vrcp.pop %v928
        %v961 = vrcp.pop %v929
        %v962 = vrcp.pop %v930
        %v963 = vrcp.pop %v931
        %v964 = vrcp.pop %v932
        %v965 = vrcp.pop %v933
        %v966 = vmul.f32 %v774, %v934
        %v967 = vmul.f32 %v775, %v935
        %v968 = vmul.f32 %v776, %v936
        %v969 = vmul.f32 %v777, %v937
        %v970 = vmul.f32 %v778, %v938
        %v971 = vmul.f32 %v779, %v939
        %v972 = vmul.f32 %v780, %v940
        %v973 = vmul.f32 %v781, %v941
        %v974 = vmul.f32 %v782, %v942
        %v975 = vmul.f32 %v783, %v943
        %v976 = vmul.f32 %v784, %v944
        %v977 = vmul.f32 %v785, %v945
        %v978 = vmul.f32 %v786, %v946
        %v979 = vmul.f32 %v787, %v947
        %v980 = vmul.f32 %v788, %v948
        %v981 = vmul.f32 %v789, %v949
        %v982 = vmul.f32 %v790, %v950
        %v983 = vmul.f32 %v791, %v951
        %v984 = vmul.f32 %v792, %v952
        %v985 = vmul.f32 %v793, %v953
        %v986 = vmul.f32 %v794, %v954
        %v987 = vmul.f32 %v795, %v955
        %v988 = vmul.f32 %v796, %v956
        %v989 = vmul.f32 %v797, %v957
        %v990 = vmul.f32 %v798, %v958
        %v991 = vmul.f32 %v799, %v959
        %v992 = vmul.f32 %v800, %v960
        %v993 = vmul.f32 %v801, %v961
        %v994 = vmul.f32 %v802, %v962
        %v995 = vmul.f32 %v803, %v963
        %v996 = vmul.f32 %v804, %v964
        %v997 = vmul.f32 %v805, %v965
        %s998 = smul.u32 %s22, 256
        %v999 = vlaneseq
        %v1000 = vshrl.u32 %v999, 7
        %v1001 = vadd.s32 %v1000, 8
        %v1002 = vadd.s32 %v1000, 16
        %v1003 = vadd.s32 %v1000, 24
        %v1004 = vadd.s32 %v1000, 32
        %v1005 = vadd.s32 %v1000, 40
        %v1006 = vadd.s32 %v1000, 48
        %v1007 = vadd.s32 %v1000, 56
        %v1008 = vadd.s32 %v1000, 64
        %v1009 = vadd.s32 %v1000, 72
        %v1010 = vadd.s32 %v1000, 80
        %v1011 = vadd.s32 %v1000, 88
        %v1012 = vadd.s32 %v1000, 96
        %v1013 = vadd.s32 %v1000, 104
        %v1014 = vadd.s32 %v1000, 112
        %v1015 = vadd.s32 %v1000, 120
        %v1016 = vadd.s32 %v1000, 128
        %v1017 = vadd.s32 %v1000, 136
        %v1018 = vadd.s32 %v1000, 144
        %v1019 = vadd.s32 %v1000, 152
        %v1020 = vadd.s32 %v1000, 160
        %v1021 = vadd.s32 %v1000, 168
        %v1022 = vadd.s32 %v1000, 176
        %v1023 = vadd.s32 %v1000, 184
        %v1024 = vadd.s32 %v1000, 192
        %v1025 = vadd.s32 %v1000, 200
        %v1026 = vadd.s32 %v1000, 208
        %v1027 = vadd.s32 %v1000, 216
        %v1028 = vadd.s32 %v1000, 224
        %v1029 = vadd.s32 %v1000, 232
        %v1030 = vadd.s32 %v1000, 240
        %v1031 = vadd.s32 %v1000, 248
        %v1032 = vstv %s998
        %v1033 = vadd.s32 %v1032, %v1000
        %v1034 = vadd.s32 %v1032, %v1001
        %v1035 = vadd.s32 %v1032, %v1002
        %v1036 = vadd.s32 %v1032, %v1003
        %v1037 = vadd.s32 %v1032, %v1004
        %v1038 = vadd.s32 %v1032, %v1005
        %v1039 = vadd.s32 %v1032, %v1006
        %v1040 = vadd.s32 %v1032, %v1007
        %v1041 = vadd.s32 %v1032, %v1008
        %v1042 = vadd.s32 %v1032, %v1009
        %v1043 = vadd.s32 %v1032, %v1010
        %v1044 = vadd.s32 %v1032, %v1011
        %v1045 = vadd.s32 %v1032, %v1012
        %v1046 = vadd.s32 %v1032, %v1013
        %v1047 = vadd.s32 %v1032, %v1014
        %v1048 = vadd.s32 %v1032, %v1015
        %v1049 = vadd.s32 %v1032, %v1016
        %v1050 = vadd.s32 %v1032, %v1017
        %v1051 = vadd.s32 %v1032, %v1018
        %v1052 = vadd.s32 %v1032, %v1019
        %v1053 = vadd.s32 %v1032, %v1020
        %v1054 = vadd.s32 %v1032, %v1021
        %v1055 = vadd.s32 %v1032, %v1022
        %v1056 = vadd.s32 %v1032, %v1023
        %v1057 = vadd.s32 %v1032, %v1024
        %v1058 = vadd.s32 %v1032, %v1025
        %v1059 = vadd.s32 %v1032, %v1026
        %v1060 = vadd.s32 %v1032, %v1027
        %v1061 = vadd.s32 %v1032, %v1028
        %v1062 = vadd.s32 %v1032, %v1029
        %v1063 = vadd.s32 %v1032, %v1030
        %v1064 = vadd.s32 %v1032, %v1031
        %vm1065 = vcmp.lt.s32.totalorder %v1033, 384
        %vm1066 = vcmp.lt.s32.totalorder %v1034, 384
        %vm1067 = vcmp.lt.s32.totalorder %v1035, 384
        %vm1068 = vcmp.lt.s32.totalorder %v1036, 384
        %vm1069 = vcmp.lt.s32.totalorder %v1037, 384
        %vm1070 = vcmp.lt.s32.totalorder %v1038, 384
        %vm1071 = vcmp.lt.s32.totalorder %v1039, 384
        %vm1072 = vcmp.lt.s32.totalorder %v1040, 384
        %vm1073 = vcmp.lt.s32.totalorder %v1041, 384
        %vm1074 = vcmp.lt.s32.totalorder %v1042, 384
        %vm1075 = vcmp.lt.s32.totalorder %v1043, 384
        %vm1076 = vcmp.lt.s32.totalorder %v1044, 384
        %vm1077 = vcmp.lt.s32.totalorder %v1045, 384
        %vm1078 = vcmp.lt.s32.totalorder %v1046, 384
        %vm1079 = vcmp.lt.s32.totalorder %v1047, 384
        %vm1080 = vcmp.lt.s32.totalorder %v1048, 384
        %vm1081 = vcmp.lt.s32.totalorder %v1049, 384
        %vm1082 = vcmp.lt.s32.totalorder %v1050, 384
        %vm1083 = vcmp.lt.s32.totalorder %v1051, 384
        %vm1084 = vcmp.lt.s32.totalorder %v1052, 384
        %vm1085 = vcmp.lt.s32.totalorder %v1053, 384
        %vm1086 = vcmp.lt.s32.totalorder %v1054, 384
        %vm1087 = vcmp.lt.s32.totalorder %v1055, 384
        %vm1088 = vcmp.lt.s32.totalorder %v1056, 384
        %vm1089 = vcmp.lt.s32.totalorder %v1057, 384
        %vm1090 = vcmp.lt.s32.totalorder %v1058, 384
        %vm1091 = vcmp.lt.s32.totalorder %v1059, 384
        %vm1092 = vcmp.lt.s32.totalorder %v1060, 384
        %vm1093 = vcmp.lt.s32.totalorder %v1061, 384
        %vm1094 = vcmp.lt.s32.totalorder %v1062, 384
        %vm1095 = vcmp.lt.s32.totalorder %v1063, 384
        %vm1096 = vcmp.lt.s32.totalorder %v1064, 384
        %v1097 = vsel %vm1065, 1, 0
        %v1098 = vsel %vm1066, 1, 0
        %v1099 = vsel %vm1067, 1, 0
        %v1100 = vsel %vm1068, 1, 0
        %v1101 = vsel %vm1069, 1, 0
        %v1102 = vsel %vm1070, 1, 0
        %v1103 = vsel %vm1071, 1, 0
        %v1104 = vsel %vm1072, 1, 0
        %v1105 = vsel %vm1073, 1, 0
        %v1106 = vsel %vm1074, 1, 0
        %v1107 = vsel %vm1075, 1, 0
        %v1108 = vsel %vm1076, 1, 0
        %v1109 = vsel %vm1077, 1, 0
        %v1110 = vsel %vm1078, 1, 0
        %v1111 = vsel %vm1079, 1, 0
        %v1112 = vsel %vm1080, 1, 0
        %v1113 = vsel %vm1081, 1, 0
        %v1114 = vsel %vm1082, 1, 0
        %v1115 = vsel %vm1083, 1, 0
        %v1116 = vsel %vm1084, 1, 0
        %v1117 = vsel %vm1085, 1, 0
        %v1118 = vsel %vm1086, 1, 0
        %v1119 = vsel %vm1087, 1, 0
        %v1120 = vsel %vm1088, 1, 0
        %v1121 = vsel %vm1089, 1, 0
        %v1122 = vsel %vm1090, 1, 0
        %v1123 = vsel %vm1091, 1, 0
        %v1124 = vsel %vm1092, 1, 0
        %v1125 = vsel %vm1093, 1, 0
        %v1126 = vsel %vm1094, 1, 0
        %v1127 = vsel %vm1095, 1, 0
        %v1128 = vsel %vm1096, 1, 0
        %v1129 = vcvt.s32.f32 %v1097
        %v1130 = vcvt.s32.f32 %v1098
        %v1131 = vcvt.s32.f32 %v1099
        %v1132 = vcvt.s32.f32 %v1100
        %v1133 = vcvt.s32.f32 %v1101
        %v1134 = vcvt.s32.f32 %v1102
        %v1135 = vcvt.s32.f32 %v1103
        %v1136 = vcvt.s32.f32 %v1104
        %v1137 = vcvt.s32.f32 %v1105
        %v1138 = vcvt.s32.f32 %v1106
        %v1139 = vcvt.s32.f32 %v1107
        %v1140 = vcvt.s32.f32 %v1108
        %v1141 = vcvt.s32.f32 %v1109
        %v1142 = vcvt.s32.f32 %v1110
        %v1143 = vcvt.s32.f32 %v1111
        %v1144 = vcvt.s32.f32 %v1112
        %v1145 = vcvt.s32.f32 %v1113
        %v1146 = vcvt.s32.f32 %v1114
        %v1147 = vcvt.s32.f32 %v1115
        %v1148 = vcvt.s32.f32 %v1116
        %v1149 = vcvt.s32.f32 %v1117
        %v1150 = vcvt.s32.f32 %v1118
        %v1151 = vcvt.s32.f32 %v1119
        %v1152 = vcvt.s32.f32 %v1120
        %v1153 = vcvt.s32.f32 %v1121
        %v1154 = vcvt.s32.f32 %v1122
        %v1155 = vcvt.s32.f32 %v1123
        %v1156 = vcvt.s32.f32 %v1124
        %v1157 = vcvt.s32.f32 %v1125
        %v1158 = vcvt.s32.f32 %v1126
        %v1159 = vcvt.s32.f32 %v1127
        %v1160 = vcvt.s32.f32 %v1128
        %v1161 = vmul.f32 %v966, %v1129
        %v1162 = vmul.f32 %v967, %v1130
        %v1163 = vmul.f32 %v968, %v1131
        %v1164 = vmul.f32 %v969, %v1132
        %v1165 = vmul.f32 %v970, %v1133
        %v1166 = vmul.f32 %v971, %v1134
        %v1167 = vmul.f32 %v972, %v1135
        %v1168 = vmul.f32 %v973, %v1136
        %v1169 = vmul.f32 %v974, %v1137
        %v1170 = vmul.f32 %v975, %v1138
        %v1171 = vmul.f32 %v976, %v1139
        %v1172 = vmul.f32 %v977, %v1140
        %v1173 = vmul.f32 %v978, %v1141
        %v1174 = vmul.f32 %v979, %v1142
        %v1175 = vmul.f32 %v980, %v1143
        %v1176 = vmul.f32 %v981, %v1144
        %v1177 = vmul.f32 %v982, %v1145
        %v1178 = vmul.f32 %v983, %v1146
        %v1179 = vmul.f32 %v984, %v1147
        %v1180 = vmul.f32 %v985, %v1148
        %v1181 = vmul.f32 %v986, %v1149
        %v1182 = vmul.f32 %v987, %v1150
        %v1183 = vmul.f32 %v988, %v1151
        %v1184 = vmul.f32 %v989, %v1152
        %v1185 = vmul.f32 %v990, %v1153
        %v1186 = vmul.f32 %v991, %v1154
        %v1187 = vmul.f32 %v992, %v1155
        %v1188 = vmul.f32 %v993, %v1156
        %v1189 = vmul.f32 %v994, %v1157
        %v1190 = vmul.f32 %v995, %v1158
        %v1191 = vmul.f32 %v996, %v1159
        %v1192 = vmul.f32 %v997, %v1160
        %v1193 = vadd.f32 %v1161, %v1162
        %v1194 = vadd.f32 %v1193, %v1163
        %v1195 = vadd.f32 %v1194, %v1164
        %v1196 = vadd.f32 %v1195, %v1165
        %v1197 = vadd.f32 %v1196, %v1166
        %v1198 = vadd.f32 %v1197, %v1167
        %v1199 = vadd.f32 %v1198, %v1168
        %v1200 = vadd.f32 %v1199, %v1169
        %v1201 = vadd.f32 %v1200, %v1170
        %v1202 = vadd.f32 %v1201, %v1171
        %v1203 = vadd.f32 %v1202, %v1172
        %v1204 = vadd.f32 %v1203, %v1173
        %v1205 = vadd.f32 %v1204, %v1174
        %v1206 = vadd.f32 %v1205, %v1175
        %v1207 = vadd.f32 %v1206, %v1176
        %v1208 = vadd.f32 %v1207, %v1177
        %v1209 = vadd.f32 %v1208, %v1178
        %v1210 = vadd.f32 %v1209, %v1179
        %v1211 = vadd.f32 %v1210, %v1180
        %v1212 = vadd.f32 %v1211, %v1181
        %v1213 = vadd.f32 %v1212, %v1182
        %v1214 = vadd.f32 %v1213, %v1183
        %v1215 = vadd.f32 %v1214, %v1184
        %v1216 = vadd.f32 %v1215, %v1185
        %v1217 = vadd.f32 %v1216, %v1186
        %v1218 = vadd.f32 %v1217, %v1187
        %v1219 = vadd.f32 %v1218, %v1188
        %v1220 = vadd.f32 %v1219, %v1189
        %v1221 = vadd.f32 %v1220, %v1190
        %v1222 = vadd.f32 %v1221, %v1191
        %v1223 = vadd.f32 %v1222, %v1192
        %v1224 = vrot.slane %v1223, 4
        %v1225 = vadd.f32 %v1223, %v1224
        %v1226 = vrot.slane %v1225, 2
        %v1227 = vadd.f32 %v1225, %v1226
        %v1228 = vrot.slane %v1227, 1
        %v1229 = vadd.f32 %v1227, %v1228
        %1230 = vst [vmem:[%s202] sm:$0x1] %v1229
        %v1231 = vmul.f32 %v1161, %v966
        %v1232 = vmul.f32 %v1162, %v967
        %v1233 = vmul.f32 %v1163, %v968
        %v1234 = vmul.f32 %v1164, %v969
        %v1235 = vmul.f32 %v1165, %v970
        %v1236 = vmul.f32 %v1166, %v971
        %v1237 = vmul.f32 %v1167, %v972
        %v1238 = vmul.f32 %v1168, %v973
        %v1239 = vmul.f32 %v1169, %v974
        %v1240 = vmul.f32 %v1170, %v975
        %v1241 = vmul.f32 %v1171, %v976
        %v1242 = vmul.f32 %v1172, %v977
        %v1243 = vmul.f32 %v1173, %v978
        %v1244 = vmul.f32 %v1174, %v979
        %v1245 = vmul.f32 %v1175, %v980
        %v1246 = vmul.f32 %v1176, %v981
        %v1247 = vmul.f32 %v1177, %v982
        %v1248 = vmul.f32 %v1178, %v983
        %v1249 = vmul.f32 %v1179, %v984
        %v1250 = vmul.f32 %v1180, %v985
        %v1251 = vmul.f32 %v1181, %v986
        %v1252 = vmul.f32 %v1182, %v987
        %v1253 = vmul.f32 %v1183, %v988
        %v1254 = vmul.f32 %v1184, %v989
        %v1255 = vmul.f32 %v1185, %v990
        %v1256 = vmul.f32 %v1186, %v991
        %v1257 = vmul.f32 %v1187, %v992
        %v1258 = vmul.f32 %v1188, %v993
        %v1259 = vmul.f32 %v1189, %v994
        %v1260 = vmul.f32 %v1190, %v995
        %v1261 = vmul.f32 %v1191, %v996
        %v1262 = vmul.f32 %v1192, %v997
        %v1263 = vadd.f32 %v1231, %v1232
        %v1264 = vadd.f32 %v1263, %v1233
        %v1265 = vadd.f32 %v1264, %v1234
        %v1266 = vadd.f32 %v1265, %v1235
        %v1267 = vadd.f32 %v1266, %v1236
        %v1268 = vadd.f32 %v1267, %v1237
        %v1269 = vadd.f32 %v1268, %v1238
        %v1270 = vadd.f32 %v1269, %v1239
        %v1271 = vadd.f32 %v1270, %v1240
        %v1272 = vadd.f32 %v1271, %v1241
        %v1273 = vadd.f32 %v1272, %v1242
        %v1274 = vadd.f32 %v1273, %v1243
        %v1275 = vadd.f32 %v1274, %v1244
        %v1276 = vadd.f32 %v1275, %v1245
        %v1277 = vadd.f32 %v1276, %v1246
        %v1278 = vadd.f32 %v1277, %v1247
        %v1279 = vadd.f32 %v1278, %v1248
        %v1280 = vadd.f32 %v1279, %v1249
        %v1281 = vadd.f32 %v1280, %v1250
        %v1282 = vadd.f32 %v1281, %v1251
        %v1283 = vadd.f32 %v1282, %v1252
        %v1284 = vadd.f32 %v1283, %v1253
        %v1285 = vadd.f32 %v1284, %v1254
        %v1286 = vadd.f32 %v1285, %v1255
        %v1287 = vadd.f32 %v1286, %v1256
        %v1288 = vadd.f32 %v1287, %v1257
        %v1289 = vadd.f32 %v1288, %v1258
        %v1290 = vadd.f32 %v1289, %v1259
        %v1291 = vadd.f32 %v1290, %v1260
        %v1292 = vadd.f32 %v1291, %v1261
        %v1293 = vadd.f32 %v1292, %v1262
        %v1294 = vrot.slane %v1293, 4
        %v1295 = vadd.f32 %v1293, %v1294
        %v1296 = vrot.slane %v1295, 2
        %v1297 = vadd.f32 %v1295, %v1296
        %v1298 = vrot.slane %v1297, 1
        %v1299 = vadd.f32 %v1297, %v1298
        %1300 = vst [vmem:[%s202 + $0x1] sm:$0x1] %v1299
        %v1301 = vpack.c.bf16 %v967, %v966
        %v1302 = vpack.c.bf16 %v969, %v968
        %v1303 = vpack.c.bf16 %v971, %v970
        %v1304 = vpack.c.bf16 %v973, %v972
        %v1305 = vpack.c.bf16 %v975, %v974
        %v1306 = vpack.c.bf16 %v977, %v976
        %v1307 = vpack.c.bf16 %v979, %v978
        %v1308 = vpack.c.bf16 %v981, %v980
        %v1309 = vpack.c.bf16 %v983, %v982
        %v1310 = vpack.c.bf16 %v985, %v984
        %v1311 = vpack.c.bf16 %v987, %v986
        %v1312 = vpack.c.bf16 %v989, %v988
        %v1313 = vpack.c.bf16 %v991, %v990
        %v1314 = vpack.c.bf16 %v993, %v992
        %v1315 = vpack.c.bf16 %v995, %v994
        %v1316 = vpack.c.bf16 %v997, %v996
        %v1333 = vunpack.c.l.b16 %v1301
        %v1334 = vunpack.c.h.b16 %v1301
        %v1335 = vunpack.c.l.b16 %v1302
        %v1336 = vunpack.c.h.b16 %v1302
        %v1337 = vunpack.c.l.b16 %v1303
        %v1338 = vunpack.c.h.b16 %v1303
        %v1339 = vunpack.c.l.b16 %v1304
        %v1340 = vunpack.c.h.b16 %v1304
        %v1341 = vunpack.c.l.b16 %v1305
        %v1342 = vunpack.c.h.b16 %v1305
        %v1343 = vunpack.c.l.b16 %v1306
        %v1344 = vunpack.c.h.b16 %v1306
        %v1345 = vunpack.c.l.b16 %v1307
        %v1346 = vunpack.c.h.b16 %v1307
        %v1347 = vunpack.c.l.b16 %v1308
        %v1348 = vunpack.c.h.b16 %v1308
        %v1349 = vunpack.c.l.b16 %v1309
        %v1350 = vunpack.c.h.b16 %v1309
        %v1351 = vunpack.c.l.b16 %v1310
        %v1352 = vunpack.c.h.b16 %v1310
        %v1353 = vunpack.c.l.b16 %v1311
        %v1354 = vunpack.c.h.b16 %v1311
        %v1355 = vunpack.c.l.b16 %v1312
        %v1356 = vunpack.c.h.b16 %v1312
        %v1357 = vunpack.c.l.b16 %v1313
        %v1358 = vunpack.c.h.b16 %v1313
        %v1359 = vunpack.c.l.b16 %v1314
        %v1360 = vunpack.c.h.b16 %v1314
        %v1361 = vunpack.c.l.b16 %v1315
        %v1362 = vunpack.c.h.b16 %v1315
        %v1363 = vunpack.c.l.b16 %v1316
        %v1364 = vunpack.c.h.b16 %v1316
        %v1365 = vpack.c.b16 %v1333, %v1333
        %v1366 = vpack.c.b16 %v1334, %v1334
        %v1367 = vpack.c.b16 %v1335, %v1335
        %v1368 = vpack.c.b16 %v1336, %v1336
        %v1369 = vpack.c.b16 %v1337, %v1337
        %v1370 = vpack.c.b16 %v1338, %v1338
        %v1371 = vpack.c.b16 %v1339, %v1339
        %v1372 = vpack.c.b16 %v1340, %v1340
        %v1373 = vpack.c.b16 %v1341, %v1341
        %v1374 = vpack.c.b16 %v1342, %v1342
        %v1375 = vpack.c.b16 %v1343, %v1343
        %v1376 = vpack.c.b16 %v1344, %v1344
        %v1377 = vpack.c.b16 %v1345, %v1345
        %v1378 = vpack.c.b16 %v1346, %v1346
        %v1379 = vpack.c.b16 %v1347, %v1347
        %v1380 = vpack.c.b16 %v1348, %v1348
        %v1381 = vpack.c.b16 %v1349, %v1349
        %v1382 = vpack.c.b16 %v1350, %v1350
        %v1383 = vpack.c.b16 %v1351, %v1351
        %v1384 = vpack.c.b16 %v1352, %v1352
        %v1385 = vpack.c.b16 %v1353, %v1353
        %v1386 = vpack.c.b16 %v1354, %v1354
        %v1387 = vpack.c.b16 %v1355, %v1355
        %v1388 = vpack.c.b16 %v1356, %v1356
        %v1389 = vpack.c.b16 %v1357, %v1357
        %v1390 = vpack.c.b16 %v1358, %v1358
        %v1391 = vpack.c.b16 %v1359, %v1359
        %v1392 = vpack.c.b16 %v1360, %v1360
        %v1393 = vpack.c.b16 %v1361, %v1361
        %v1394 = vpack.c.b16 %v1362, %v1362
        %v1395 = vpack.c.b16 %v1363, %v1363
        %v1396 = vpack.c.b16 %v1364, %v1364
        %1429 = vst [vmem:[%s195] sm:$0xf] %v1365
        %1430 = vst [vmem:[%s195 + $0x4] sm:$0xf] %v1366
        %1431 = vst [vmem:[%s195 + $0x8] sm:$0xf] %v1367
        %1432 = vst [vmem:[%s195 + $0xc] sm:$0xf] %v1368
        %1433 = vst [vmem:[%s195 + $0x10] sm:$0xf] %v1369
        %1434 = vst [vmem:[%s195 + $0x14] sm:$0xf] %v1370
        %1435 = vst [vmem:[%s195 + $0x18] sm:$0xf] %v1371
        %1436 = vst [vmem:[%s195 + $0x1c] sm:$0xf] %v1372
        %1437 = vst [vmem:[%s195 + $0x20] sm:$0xf] %v1373
        %1438 = vst [vmem:[%s195 + $0x24] sm:$0xf] %v1374
        %1439 = vst [vmem:[%s195 + $0x28] sm:$0xf] %v1375
        %1440 = vst [vmem:[%s195 + $0x2c] sm:$0xf] %v1376
        %1441 = vst [vmem:[%s195 + $0x30] sm:$0xf] %v1377
        %1442 = vst [vmem:[%s195 + $0x34] sm:$0xf] %v1378
        %1443 = vst [vmem:[%s195 + $0x38] sm:$0xf] %v1379
        %1444 = vst [vmem:[%s195 + $0x3c] sm:$0xf] %v1380
        %1445 = vst [vmem:[%s195 + $0x40] sm:$0xf] %v1381
        %1446 = vst [vmem:[%s195 + $0x44] sm:$0xf] %v1382
        %1447 = vst [vmem:[%s195 + $0x48] sm:$0xf] %v1383
        %1448 = vst [vmem:[%s195 + $0x4c] sm:$0xf] %v1384
        %1449 = vst [vmem:[%s195 + $0x50] sm:$0xf] %v1385
        %1450 = vst [vmem:[%s195 + $0x54] sm:$0xf] %v1386
        %1451 = vst [vmem:[%s195 + $0x58] sm:$0xf] %v1387
        %1452 = vst [vmem:[%s195 + $0x5c] sm:$0xf] %v1388
        %1453 = vst [vmem:[%s195 + $0x60] sm:$0xf] %v1389
        %1454 = vst [vmem:[%s195 + $0x64] sm:$0xf] %v1390
        %1455 = vst [vmem:[%s195 + $0x68] sm:$0xf] %v1391
        %1456 = vst [vmem:[%s195 + $0x6c] sm:$0xf] %v1392
        %1457 = vst [vmem:[%s195 + $0x70] sm:$0xf] %v1393
        %1458 = vst [vmem:[%s195 + $0x74] sm:$0xf] %v1394
        %1459 = vst [vmem:[%s195 + $0x78] sm:$0xf] %v1395
        %1460 = vst [vmem:[%s195 + $0x7c] sm:$0xf] %v1396
        %s1461 = sand.u32 %s98, 1
        %s1462 = scalar_lea.sflag [#allocation3], %s1461
        %s1463 = sand.u32 %s98, 1
        %s1464 = smul.addr %s1463, 128
        %s1465 = scalar_lea.vmem [#allocation2], %s1464
        %s1466 = sand.u32 %s124, 1
        %s1467 = scalar_lea.sflag [#allocation5], %s1466
        %s1468 = sand.u32 %s124, 1
        %s1469 = smul.addr %s1468, 8
        %s1470 = scalar_lea.vmem [#allocation4], %s1469
        // Predicated region
        $region33: #{tpu_custom_call.1} parent=31 // pred_check
          %p1471 = pneg %p108
        $region34: #{tpu_custom_call.1} parent=31 // pred_check_branch
          %1473 = sbr.rel (%p1471) target = $region36
        $region35: #{tpu_custom_call.1} parent=31 // pred_region
          %s1474 = smul.u32 32, %s22
          %s1476 = ssub.s32 2048, 2048
          %1477 = vsyncadd %s1462, %s1476
          %s1478 = smul.addr %s1474, 64
          %s1479 = scalar_lea.hbm %s3, %s1478
          %s1480 = sshll.u32 %s1465, 4
          %s1481 = int_to_ptr.vmem [resolvable:$true] %s1480
          %1486 = dma.vmem_to_hbm [thread:$0]  %s1481, 2048, %s1479, %s1462, 64, 64, 4
        $region36: #{tpu_custom_call.1} parent=31 // pred_fallthru
          _
        // Predicated region
        $region37: #{tpu_custom_call.1} parent=31 // pred_check
          %p1487 = pneg %p134
        $region38: #{tpu_custom_call.1} parent=31 // pred_check_branch
          %1489 = sbr.rel (%p1487) target = $region40
        $region39: #{tpu_custom_call.1} parent=31 // pred_region
          %s1491 = ssub.s32 128, 128
          %1492 = vsyncadd %s1467, %s1491
          %s1493 = smul.addr %s22, 128
          %s1494 = scalar_lea.hbm %s4, %s1493
          %s1496 = sshll.u32 %s1470, 4
          %s1497 = int_to_ptr.vmem [resolvable:$true] %s1496
          %1499 = dma.vmem_to_hbm [thread:$0]  %s1497, 128, %s1494, %s1467
        $region40: #{tpu_custom_call.1} parent=31 // pred_fallthru
          _
      $region32: #{tpu_custom_call.1} parent=5 // pred_fallthru
        _
      %p1500 = scmp.le.s32.totalorder 2, %s17
      // Predicated region
      $region41: #{tpu_custom_call.1} parent=5 // pred_check
        %p1501 = pneg %p1500
      $region42: #{tpu_custom_call.1} parent=5 // pred_check_branch
        %1503 = sbr.rel (%p1501) target = $region44
      $region43: #{tpu_custom_call.1} parent=5 // pred_region
        %s1504 = ssub.s32 %s17, 2
        // Predicated region
        $region45: #{tpu_custom_call.1} parent=43 // pred_check
          %p1505 = pneg %p114
        $region46: #{tpu_custom_call.1} parent=43 // pred_check_branch
          %1507 = sbr.rel (%p1505) target = $region48
        $region47: #{tpu_custom_call.1} parent=43 // pred_region
          %s1508 = sand.u32 %s99, 1
          %s1509 = scalar_lea.sflag [#allocation3], %s1508
          %s1510 = sand.u32 %s99, 1
          %s1511 = smul.addr %s1510, 128
          %s1512 = scalar_lea.vmem [#allocation2], %s1511
          %1513 = dma.done %s1509, 2048
        $region48: #{tpu_custom_call.1} parent=43 // pred_fallthru
          _
        // Predicated region
        $region49: #{tpu_custom_call.1} parent=43 // pred_check
          %p1514 = pneg %p140
        $region50: #{tpu_custom_call.1} parent=43 // pred_check_branch
          %1516 = sbr.rel (%p1514) target = $region52
        $region51: #{tpu_custom_call.1} parent=43 // pred_region
          %s1517 = sand.u32 %s125, 1
          %s1518 = scalar_lea.sflag [#allocation5], %s1517
          %s1519 = sand.u32 %s125, 1
          %s1520 = smul.addr %s1519, 8
          %s1521 = scalar_lea.vmem [#allocation4], %s1520
          %1522 = dma.done %s1518, 128
        $region52: #{tpu_custom_call.1} parent=43 // pred_fallthru
          _
      $region44: #{tpu_custom_call.1} parent=5 // pred_fallthru
        _
    $region6: #{tpu_custom_call.1} parent=1 // loop_footer
      %s21 = sadd.s32 1, %s17
    $region7: #{tpu_custom_call.1} parent=1 // loop_footer_branch
      %16 = sbr.rel target = $region3
    $region8: #{tpu_custom_call.1} parent=1 // loop_exit
      _
    %1523 = vsyncpa [#allocation3], 1
    %s1524 = scalar_lea.sflag [#allocation3], 1
    %1525 = vsyncpa %s1524, 1
    %1526 = vsyncpa [#allocation5], 1
    %s1527 = scalar_lea.sflag [#allocation5], 1
    %1528 = vsyncpa %s1527, 1

</llo_original>
